<compile_context>
chip_gen: v6e
topology: v6e:2x2x1
jax: 0.10.0
libtpu: 0.0.40
codegen_flags: <defaults>
</compile_context>

<pallas_src>
import functools

import jax
import jax.numpy as jnp
from jax import lax
from jax.experimental import pallas as pl
from jax.experimental.pallas import tpu as pltpu

# ---- small synthetic sizes (gate layers are hard-coded Linear(64,64) -> dim=64) ----
N_USERS = 8
N_ITEMS = 16
N_ENTITIES = 32          # items are the first N_ITEMS entities
N_RELATIONS = 8
DIM = 64
N_HOPS = 2
N_EDGES = 64
N_INTER = 32
BATCH = 8
DECAY = 1e-4


def _log_sigmoid(x):
    # numerically stable logsigmoid built from primitives that lower on Mosaic
    return -(jnp.maximum(-x, 0.0) + jnp.log(1.0 + jnp.exp(-jnp.abs(x))))


def recommender_kernel(x0_ref, relw_ref,
                       tailpad_c_ref, etype_c_ref, head_r_ref,
                       mrow_c_ref, mrow_r_ref, mcol_c_ref, mcol_r_ref,
                       w1t_ref, w2t_ref, bpr_c_ref,
                       loss_ref, res_ref, *, n_hops, n_items, n_entities, decay):
    f32 = jnp.float32
    bf16 = jnp.bfloat16

    x = x0_ref[...]                      # (H, d) stacked [entity_emb ; user_emb], f32
    relw = relw_ref[...]                 # (Nr, d) f32

    n_stack = x.shape[0]                 # H = Ne + Nu
    dim = x.shape[1]
    n_edges = etype_c_ref.shape[0]       # E
    n_relations = relw.shape[0]
    n_inter = mrow_c_ref.shape[0]        # M (user-item interactions)
    n_rows = n_edges + n_stack           # gather-matrix rows: E tail-gathers + H agg rows

    def oh_cols(idx_col, n):             # (K,1) int32 -> (K, n) bool one-hot
        k = idx_col.shape[0]
        return lax.broadcasted_iota(jnp.int32, (k, n), 1) == idx_col

    def oh_rows(idx_row, n):             # (1,K) int32 -> (n, K) bool one-hot (transposed)
        k = idx_row.shape[1]
        return lax.broadcasted_iota(jnp.int32, (n, k), 0) == idx_row

    # ---------------- hop-invariant setup (off the per-hop critical path) ----------------
    # Block-"diagonal" gather matrix over the stacked state x = [entity ; user]:
    #   rows [0:E)   : one-hot(tail)                  -> entity_emb[tail]
    #   rows [E:E+H) : (1/count)-scaled user->item interaction block -> scatter_mean over users
    top = oh_cols(tailpad_c_ref[...], n_stack).astype(f32)                      # (R, H), rows>=E are zero (pad=-1)
    pc_oh = (lax.broadcasted_iota(jnp.int32, (n_rows, n_inter), 0)
             == (mcol_r_ref[...] + n_edges)).astype(f32)                        # (R, M) item rows only
    col_cnt = jnp.sum(pc_oh, axis=1, keepdims=True)
    pc_scaled = (pc_oh * (1.0 / jnp.maximum(col_cnt, 1.0))).astype(bf16)        # inv_col folded in
    pr_oh = (lax.broadcasted_iota(jnp.int32, (n_inter, n_stack), 1)
             == (mrow_c_ref[...] + n_entities)).astype(bf16)                    # (M, H) user cols only
    bottom = jnp.dot(pc_scaled, pr_oh, preferred_element_type=f32)              # (R, H)
    gather_mat = (top + bottom).astype(bf16)                                    # (R, H), disjoint blocks

    # scatter_mean(head) matrix at stacked height (inv_head folded in; rows >= Ne are zero)
    head_oh = oh_rows(head_r_ref[...], n_stack).astype(f32)                     # (H, E)
    head_cnt = jnp.sum(head_oh, axis=1, keepdims=True)
    head_scaled = (head_oh * (1.0 / jnp.maximum(head_cnt, 1.0))).astype(bf16)   # (H, E)

    # relation message embeddings (weight[edge_type]) — hop-invariant
    etype_oh = oh_cols(etype_c_ref[...], n_relations).astype(bf16)              # (E, Nr)
    rel_emb = jnp.dot(etype_oh, relw.astype(bf16), preferred_element_type=f32)  # (E, d) f32

    # user <- item interaction-count matrix at stacked height (rows [Ne:H), cols < n_items)
    ur_oh = (lax.broadcasted_iota(jnp.int32, (n_stack, n_inter), 0)
             == (mrow_r_ref[...] + n_entities)).astype(bf16)                    # (H, M)
    uc_oh = oh_cols(mcol_c_ref[...], n_stack).astype(bf16)                      # (M, H)
    u_mat = jnp.dot(ur_oh, uc_oh, preferred_element_type=f32).astype(bf16)      # (H, H) counts

    relw0_b = jnp.broadcast_to(relw[0:1, :], (n_stack, dim))                    # hoisted lane broadcast (f32, exact)
    item_mask = lax.broadcasted_iota(jnp.int32, (n_stack, 1), 0) < n_items      # (H, 1) bool

    def l2norm(v):                      # F.normalize(p=2, dim=1) via EUP rsqrt
        ss = jnp.sum(v * v, axis=1, keepdims=True)
        return v * lax.rsqrt(ss + 1e-24)

    res = x                             # stacked residual [entity_res ; user_res]

    # ---------------- hop loop (GraphConv.forward) ----------------
    for hop in range(n_hops):
        x_bf = x.astype(bf16)                                                   # one cast per hop
        # fused gathers: [entity[tail] ; scatter_mean(user_emb, mcol)] in ONE matmul
        g = jnp.dot(gather_mat, x_bf, preferred_element_type=f32)               # (R, d)
        tail_emb = g[:n_edges]                                                  # (E, d)
        i_u_agg = g[n_edges:] * relw0_b                                         # (H, d); rows >= Ne are 0

        # Aggregator.KG_forward: scatter_mean(entity[tail] * weight[type], head)
        msg = (tail_emb * rel_emb).astype(bf16)
        kg_agg = jnp.dot(head_scaled, msg, preferred_element_type=f32)          # (H, d); rows >= Ne are 0

        # gate: two accumulating matmuls (no lane concat on the critical path)
        gi = jax.nn.sigmoid(
            jnp.dot(kg_agg.astype(bf16), w1t_ref[hop], preferred_element_type=f32)
            + jnp.dot(i_u_agg.astype(bf16), w2t_ref[hop], preferred_element_type=f32))
        fusion = gi * kg_agg + (1.0 - gi) * i_u_agg                             # (H, d)

        # user aggregation (rows [Ne:H) of the stacked buffer); only item cols of u_mat are nonzero
        user_part = jnp.dot(u_mat, fusion.astype(bf16), preferred_element_type=f32)   # (H, d)

        # stacked next state: item rows -> fusion, attribute rows -> kg_agg, user rows -> user_agg
        x = l2norm(jnp.where(item_mask, fusion, kg_agg) + user_part)
        res = res + x

    # ---------------- BPR loss (create_bpr_loss) — single stacked gather matmul ----------------
    bpr_oh = oh_cols(bpr_c_ref[...], n_stack).astype(bf16)                      # (3B, H): [user | pos | neg]
    gath = jnp.dot(bpr_oh, res.astype(bf16), preferred_element_type=f32)        # (3B, d)
    batch = gath.shape[0] // 3
    u_e = gath[:batch]
    pos_e = gath[batch:2 * batch]
    neg_e = gath[2 * batch:]

    pos_s = jnp.sum(u_e * pos_e, axis=1, keepdims=True)                         # (B, 1)
    neg_s = jnp.sum(u_e * neg_e, axis=1, keepdims=True)
    mf_loss = -jnp.mean(_log_sigmoid(pos_s - neg_s))
    regularizer = 0.5 * jnp.sum(gath * gath)                                    # = 0.5*(|u|^2+|pos|^2+|neg|^2)
    loss_ref[...] = jnp.reshape(mf_loss + decay * regularizer / batch, (1, 1))
    res_ref[...] = res


def recommender_forward(entity0, user0, relw, head, tail, etype, mrow, mcol,
                        gate1, gate2, uidx, pidx, nidx,
                        *, n_hops=N_HOPS, n_items=N_ITEMS, decay=DECAY):
    """Plain-JAX glue: index prep / gate-weight transpose + gridless pallas_call."""
    n_entities = entity0.shape[0]
    n_users = user0.shape[0]
    n_stack = n_entities + n_users

    col = lambda a: a.astype(jnp.int32).reshape(-1, 1)
    row = lambda a: a.astype(jnp.int32).reshape(1, -1)

    # stacked state [entity ; user]
    x0 = jnp.concatenate([entity0, user0], axis=0).astype(jnp.float32)          # (H, d)
    # tail indices padded to the gather-matrix height (sentinel -1 never matches a column)
    tail_pad = jnp.concatenate([tail.astype(jnp.int32),
                                jnp.full((n_stack,), -1, jnp.int32)])           # (E+H,)
    # per-hop gate weights, transposed for x @ W.T, bf16 MXU operands (kept separate: no lane concat)
    w1t = jnp.swapaxes(gate1, 1, 2).astype(jnp.bfloat16)                        # (Hops, d, d)
    w2t = jnp.swapaxes(gate2, 1, 2).astype(jnp.bfloat16)
    # stacked BPR gather indices into [entity_res ; user_res]
    bpr_idx = jnp.concatenate([uidx.astype(jnp.int32) + n_entities,
                               pidx.astype(jnp.int32),
                               nidx.astype(jnp.int32)])                         # (3B,)

    args = (x0, relw.astype(jnp.float32),
            col(tail_pad), col(etype), row(head),
            col(mrow), row(mrow), col(mcol), row(mcol),
            w1t, w2t, col(bpr_idx))

    vmem = pl.BlockSpec(memory_space=pltpu.MemorySpace.VMEM)
    kern = functools.partial(recommender_kernel, n_hops=n_hops, n_items=n_items,
                             n_entities=n_entities, decay=decay)
    loss, res = pl.pallas_call(
        kern,
        out_shape=(jax.ShapeDtypeStruct((1, 1), jnp.float32),
                   jax.ShapeDtypeStruct((n_stack, entity0.shape[1]), jnp.float32)),
        in_specs=[vmem] * len(args),
        out_specs=(vmem, vmem),
    )(*args)
    return loss[0, 0], res


# ---------------- pure-JAX f32 reference (for correctness check) ----------------
def ref_forward(entity0, user0, relw, head, tail, etype, mrow, mcol,
                gate1, gate2, uidx, pidx, nidx):
    entity_emb, user_emb = entity0, user0
    entity_res, user_res = entity0, user0
    ones_e = jnp.ones((head.shape[0],), jnp.float32)
    ones_m = jnp.ones((mrow.shape[0],), jnp.float32)

    def l2n(x):
        return x / jnp.maximum(jnp.linalg.norm(x, axis=1, keepdims=True), 1e-12)

    for hop in range(N_HOPS):
        msg = entity_emb[tail] * relw[etype]
        agg = jax.ops.segment_sum(msg, head, num_segments=N_ENTITIES)
        cnt = jax.ops.segment_sum(ones_e, head, num_segments=N_ENTITIES)
        entity_agg = agg / jnp.maximum(cnt, 1.0)[:, None]
        item_kg = entity_agg[:N_ITEMS]
        att_kg = entity_agg[N_ITEMS:]
        item_neigh = user_emb[mrow] * relw[0]
        s2 = jax.ops.segment_sum(item_neigh, mcol, num_segments=N_ITEMS)
        c2 = jax.ops.segment_sum(ones_m, mcol, num_segments=N_ITEMS)
        i_u_agg = s2 / jnp.maximum(c2, 1.0)[:, None]
        gi = jax.nn.sigmoid(item_kg @ gate1[hop].T + i_u_agg @ gate2[hop].T)
        fusion = gi * item_kg + (1.0 - gi) * i_u_agg
        u_mat = jnp.zeros((N_USERS, N_ITEMS), jnp.float32).at[mrow, mcol].add(1.0)
        user_agg = u_mat @ fusion
        entity_agg = jnp.concatenate([fusion, att_kg], axis=0)
        entity_emb, user_emb = l2n(entity_agg), l2n(user_agg)
        entity_res = entity_res + entity_emb
        user_res = user_res + user_emb

    u_e, pos_e, neg_e = user_res[uidx], entity_res[pidx], entity_res[nidx]
    pos_s = jnp.sum(u_e * pos_e, axis=1)
    neg_s = jnp.sum(u_e * neg_e, axis=1)
    mf = -jnp.mean(jax.nn.log_sigmoid(pos_s - neg_s))
    reg = 0.5 * (jnp.sum(u_e ** 2) + jnp.sum(pos_e ** 2) + jnp.sum(neg_e ** 2))
    return mf + DECAY * reg / BATCH, entity_res, user_res


def _xavier(key, shape):
    bound = (6.0 / (shape[-2] + shape[-1])) ** 0.5
    return jax.random.uniform(key, shape, jnp.float32, -bound, bound)


if __name__ == "__main__":
    key = jax.random.PRNGKey(0)
    ks = jax.random.split(key, 12)

    # deterministic parameters (shapes from Recommender.__init__ / GraphConv / Aggregator)
    all_embed = _xavier(ks[0], (N_USERS + N_ENTITIES, DIM))   # self.all_embed
    user0 = all_embed[:N_USERS]
    entity0 = all_embed[N_USERS:]
    relw = _xavier(ks[1], (N_RELATIONS, DIM))                 # GraphConv.weight
    gate1 = _xavier(ks[2], (N_HOPS, DIM, DIM))                # per-hop gate1.weight
    gate2 = _xavier(ks[3], (N_HOPS, DIM, DIM))                # per-hop gate2.weight

    # deterministic graph / interactions / batch
    head = jax.random.randint(ks[4], (N_EDGES,), 0, N_ENTITIES)
    tail = jax.random.randint(ks[5], (N_EDGES,), 0, N_ENTITIES)
    etype = jax.random.randint(ks[6], (N_EDGES,), 0, N_RELATIONS)
    mrow = jax.random.randint(ks[7], (N_INTER,), 0, N_USERS)
    mcol = jax.random.randint(ks[8], (N_INTER,), 0, N_ITEMS)
    uidx = jax.random.randint(ks[9], (BATCH,), 0, N_USERS)
    pidx = jax.random.randint(ks[10], (BATCH,), 0, N_ITEMS)
    nidx = jax.random.randint(ks[11], (BATCH,), 0, N_ITEMS)

    loss, res = recommender_forward(entity0, user0, relw, head, tail, etype,
                                    mrow, mcol, gate1, gate2, uidx, pidx, nidx)
    loss = jax.block_until_ready(loss)
    res = jax.block_until_ready(res)

    ref_loss, ref_ent, ref_usr = ref_forward(entity0, user0, relw, head, tail, etype,
                                             mrow, mcol, gate1, gate2, uidx, pidx, nidx)

    # scalar loss (bf16 matmul operands, f32 accumulation -> relaxed tolerance)
    assert jnp.allclose(loss, ref_loss, rtol=2e-2, atol=2e-2), (float(loss), float(ref_loss))
    # per-element residual embeddings (tighter sanity check than the scalar loss alone)
    assert jnp.allclose(res[:N_ENTITIES], ref_ent, rtol=5e-2, atol=5e-2), "entity_res mismatch"
    assert jnp.allclose(res[N_ENTITIES:], ref_usr, rtol=5e-2, atol=5e-2), "user_res mismatch"
    print("KERNEL_OK")
</pallas_src>

<mosaic_0001>
module attributes {stable_mosaic.version = 11 : i64} {
  func.func @recommender_kernel(%arg0: memref<40x64xf32, #tpu.memory_space<vmem>>, %arg1: memref<8x64xf32, #tpu.memory_space<vmem>>, %arg2: memref<104x1xi32, #tpu.memory_space<vmem>>, %arg3: memref<64x1xi32, #tpu.memory_space<vmem>>, %arg4: memref<1x64xi32, #tpu.memory_space<vmem>>, %arg5: memref<32x1xi32, #tpu.memory_space<vmem>>, %arg6: memref<1x32xi32, #tpu.memory_space<vmem>>, %arg7: memref<32x1xi32, #tpu.memory_space<vmem>>, %arg8: memref<1x32xi32, #tpu.memory_space<vmem>>, %arg9: memref<2x64x64xbf16, #tpu.memory_space<vmem>>, %arg10: memref<2x64x64xbf16, #tpu.memory_space<vmem>>, %arg11: memref<24x1xi32, #tpu.memory_space<vmem>>, %arg12: memref<1x1xf32, #tpu.memory_space<vmem>>, %arg13: memref<40x64xf32, #tpu.memory_space<vmem>>) attributes {dimension_semantics = [], scalar_prefetch = 0 : i64, scratch_operands = 0 : i64, tpu.core_type = #tpu.core_type<tc>} {
    %c0 = arith.constant 0 : index
    %c0_0 = arith.constant 0 : index
    %0 = vector.load %arg0[%c0, %c0_0] : memref<40x64xf32, #tpu.memory_space<vmem>>, vector<40x64xf32>
    %c0_1 = arith.constant 0 : index
    %c0_2 = arith.constant 0 : index
    %1 = vector.load %arg1[%c0_1, %c0_2] : memref<8x64xf32, #tpu.memory_space<vmem>>, vector<8x64xf32>
    %c0_3 = arith.constant 0 : index
    %c0_4 = arith.constant 0 : index
    %2 = vector.load %arg2[%c0_3, %c0_4] : memref<104x1xi32, #tpu.memory_space<vmem>>, vector<104x1xi32>
    %3 = tpu.iota {dimensions = array<i32: 1>} : vector<104x40xi32>
    %4 = vector.broadcast %2 : vector<104x1xi32> to vector<104x40xi32>
    %5 = arith.cmpi eq, %3, %4 : vector<104x40xi32>
    %6 = arith.extui %5 : vector<104x40xi1> to vector<104x40xi32>
    %7 = arith.sitofp %6 : vector<104x40xi32> to vector<104x40xf32>
    %8 = tpu.iota {dimensions = array<i32: 0>} : vector<104x32xi32>
    %c0_5 = arith.constant 0 : index
    %c0_6 = arith.constant 0 : index
    %9 = vector.load %arg8[%c0_5, %c0_6] : memref<1x32xi32, #tpu.memory_space<vmem>>, vector<1x32xi32>
    %c64_i32 = arith.constant 64 : i32
    %10 = vector.broadcast %c64_i32 : i32 to vector<1x32xi32>
    %11 = arith.addi %9, %10 : vector<1x32xi32>
    %12 = vector.broadcast %11 : vector<1x32xi32> to vector<104x32xi32>
    %13 = arith.cmpi eq, %8, %12 : vector<104x32xi32>
    %14 = arith.extui %13 : vector<104x32xi1> to vector<104x32xi32>
    %15 = arith.sitofp %14 : vector<104x32xi32> to vector<104x32xf32>
    %cst = arith.constant dense<0.000000e+00> : vector<104xf32>
    %16 = vector.multi_reduction <add>, %15, %cst [1] : vector<104x32xf32> to vector<104xf32>
    %17 = vector.shape_cast %16 : vector<104xf32> to vector<104x1xf32>
    %cst_7 = arith.constant 1.000000e+00 : f32
    %18 = vector.broadcast %cst_7 : f32 to vector<104x1xf32>
    %19 = arith.maximumf %17, %18 : vector<104x1xf32>
    %cst_8 = arith.constant 1.000000e+00 : f32
    %20 = vector.broadcast %cst_8 : f32 to vector<104x1xf32>
    %21 = arith.divf %20, %19 : vector<104x1xf32>
    %22 = vector.broadcast %21 : vector<104x1xf32> to vector<104x32xf32>
    %23 = arith.mulf %15, %22 : vector<104x32xf32>
    %24 = arith.truncf %23 : vector<104x32xf32> to vector<104x32xbf16>
    %25 = tpu.iota {dimensions = array<i32: 1>} : vector<32x40xi32>
    %c0_9 = arith.constant 0 : index
    %c0_10 = arith.constant 0 : index
    %26 = vector.load %arg5[%c0_9, %c0_10] : memref<32x1xi32, #tpu.memory_space<vmem>>, vector<32x1xi32>
    %c32_i32 = arith.constant 32 : i32
    %27 = vector.broadcast %c32_i32 : i32 to vector<32x1xi32>
    %28 = arith.addi %26, %27 : vector<32x1xi32>
    %29 = vector.broadcast %28 : vector<32x1xi32> to vector<32x40xi32>
    %30 = arith.cmpi eq, %25, %29 : vector<32x40xi32>
    %31 = arith.extui %30 : vector<32x40xi1> to vector<32x40xi32>
    %32 = arith.sitofp %31 : vector<32x40xi32> to vector<32x40xf32>
    %33 = arith.truncf %32 : vector<32x40xf32> to vector<32x40xbf16>
    %cst_11 = arith.constant dense<0.000000e+00> : vector<104x40xf32>
    %34 = tpu.matmul %24, %33, %cst_11 {dimension_numbers = #tpu.dot_dimension_numbers<[1], [0], [0], [1], [0, 0, 1, 1], [], []>} : vector<104x32xbf16>, vector<32x40xbf16>, vector<104x40xf32> -> vector<104x40xf32>
    %35 = arith.addf %7, %34 : vector<104x40xf32>
    %36 = arith.truncf %35 : vector<104x40xf32> to vector<104x40xbf16>
    %c0_12 = arith.constant 0 : index
    %c0_13 = arith.constant 0 : index
    %37 = vector.load %arg4[%c0_12, %c0_13] : memref<1x64xi32, #tpu.memory_space<vmem>>, vector<1x64xi32>
    %38 = tpu.iota {dimensions = array<i32: 0>} : vector<40x64xi32>
    %39 = vector.broadcast %37 : vector<1x64xi32> to vector<40x64xi32>
    %40 = arith.cmpi eq, %38, %39 : vector<40x64xi32>
    %41 = arith.extui %40 : vector<40x64xi1> to vector<40x64xi32>
    %42 = arith.sitofp %41 : vector<40x64xi32> to vector<40x64xf32>
    %cst_14 = arith.constant dense<0.000000e+00> : vector<40xf32>
    %43 = vector.multi_reduction <add>, %42, %cst_14 [1] : vector<40x64xf32> to vector<40xf32>
    %44 = vector.shape_cast %43 : vector<40xf32> to vector<40x1xf32>
    %cst_15 = arith.constant 1.000000e+00 : f32
    %45 = vector.broadcast %cst_15 : f32 to vector<40x1xf32>
    %46 = arith.maximumf %44, %45 : vector<40x1xf32>
    %cst_16 = arith.constant 1.000000e+00 : f32
    %47 = vector.broadcast %cst_16 : f32 to vector<40x1xf32>
    %48 = arith.divf %47, %46 : vector<40x1xf32>
    %49 = vector.broadcast %48 : vector<40x1xf32> to vector<40x64xf32>
    %50 = arith.mulf %42, %49 : vector<40x64xf32>
    %51 = arith.truncf %50 : vector<40x64xf32> to vector<40x64xbf16>
    %c0_17 = arith.constant 0 : index
    %c0_18 = arith.constant 0 : index
    %52 = vector.load %arg3[%c0_17, %c0_18] : memref<64x1xi32, #tpu.memory_space<vmem>>, vector<64x1xi32>
    %53 = tpu.iota {dimensions = array<i32: 1>} : vector<64x8xi32>
    %54 = vector.broadcast %52 : vector<64x1xi32> to vector<64x8xi32>
    %55 = arith.cmpi eq, %53, %54 : vector<64x8xi32>
    %56 = arith.extui %55 : vector<64x8xi1> to vector<64x8xi32>
    %57 = arith.sitofp %56 : vector<64x8xi32> to vector<64x8xf32>
    %58 = arith.truncf %57 : vector<64x8xf32> to vector<64x8xbf16>
    %59 = arith.truncf %1 : vector<8x64xf32> to vector<8x64xbf16>
    %cst_19 = arith.constant dense<0.000000e+00> : vector<64x64xf32>
    %60 = tpu.matmul %58, %59, %cst_19 {dimension_numbers = #tpu.dot_dimension_numbers<[1], [0], [0], [1], [0, 0, 1, 1], [], []>} : vector<64x8xbf16>, vector<8x64xbf16>, vector<64x64xf32> -> vector<64x64xf32>
    %61 = tpu.iota {dimensions = array<i32: 0>} : vector<40x32xi32>
    %c0_20 = arith.constant 0 : index
    %c0_21 = arith.constant 0 : index
    %62 = vector.load %arg6[%c0_20, %c0_21] : memref<1x32xi32, #tpu.memory_space<vmem>>, vector<1x32xi32>
    %c32_i32_22 = arith.constant 32 : i32
    %63 = vector.broadcast %c32_i32_22 : i32 to vector<1x32xi32>
    %64 = arith.addi %62, %63 : vector<1x32xi32>
    %65 = vector.broadcast %64 : vector<1x32xi32> to vector<40x32xi32>
    %66 = arith.cmpi eq, %61, %65 : vector<40x32xi32>
    %67 = arith.extui %66 : vector<40x32xi1> to vector<40x32xi32>
    %68 = arith.sitofp %67 : vector<40x32xi32> to vector<40x32xf32>
    %69 = arith.truncf %68 : vector<40x32xf32> to vector<40x32xbf16>
    %c0_23 = arith.constant 0 : index
    %c0_24 = arith.constant 0 : index
    %70 = vector.load %arg7[%c0_23, %c0_24] : memref<32x1xi32, #tpu.memory_space<vmem>>, vector<32x1xi32>
    %71 = tpu.iota {dimensions = array<i32: 1>} : vector<32x40xi32>
    %72 = vector.broadcast %70 : vector<32x1xi32> to vector<32x40xi32>
    %73 = arith.cmpi eq, %71, %72 : vector<32x40xi32>
    %74 = arith.extui %73 : vector<32x40xi1> to vector<32x40xi32>
    %75 = arith.sitofp %74 : vector<32x40xi32> to vector<32x40xf32>
    %76 = arith.truncf %75 : vector<32x40xf32> to vector<32x40xbf16>
    %cst_25 = arith.constant dense<0.000000e+00> : vector<40x40xf32>
    %77 = tpu.matmul %69, %76, %cst_25 {dimension_numbers = #tpu.dot_dimension_numbers<[1], [0], [0], [1], [0, 0, 1, 1], [], []>} : vector<40x32xbf16>, vector<32x40xbf16>, vector<40x40xf32> -> vector<40x40xf32>
    %78 = arith.truncf %77 : vector<40x40xf32> to vector<40x40xbf16>
    %79 = vector.extract_strided_slice %1 {offsets = [0, 0], sizes = [1, 64], strides = [1, 1]} : vector<8x64xf32> to vector<1x64xf32>
    %80 = vector.shape_cast %79 : vector<1x64xf32> to vector<1x64xf32>
    %81 = vector.broadcast %80 : vector<1x64xf32> to vector<40x64xf32>
    %82 = tpu.iota {dimensions = array<i32: 0>} : vector<40x1xi32>
    %c16_i32 = arith.constant 16 : i32
    %83 = vector.broadcast %c16_i32 : i32 to vector<40x1xi32>
    %84 = arith.cmpi slt, %82, %83 : vector<40x1xi32>
    %85 = arith.truncf %0 : vector<40x64xf32> to vector<40x64xbf16>
    %cst_26 = arith.constant dense<0.000000e+00> : vector<104x64xf32>
    %86 = tpu.matmul %36, %85, %cst_26 {dimension_numbers = #tpu.dot_dimension_numbers<[1], [0], [0], [1], [0, 0, 1, 1], [], []>} : vector<104x40xbf16>, vector<40x64xbf16>, vector<104x64xf32> -> vector<104x64xf32>
    %87 = vector.extract_strided_slice %86 {offsets = [0, 0], sizes = [64, 64], strides = [1, 1]} : vector<104x64xf32> to vector<64x64xf32>
    %88 = vector.extract_strided_slice %86 {offsets = [64, 0], sizes = [40, 64], strides = [1, 1]} : vector<104x64xf32> to vector<40x64xf32>
    %89 = arith.mulf %88, %81 : vector<40x64xf32>
    %90 = arith.mulf %87, %60 : vector<64x64xf32>
    %91 = arith.truncf %90 : vector<64x64xf32> to vector<64x64xbf16>
    %cst_27 = arith.constant dense<0.000000e+00> : vector<40x64xf32>
    %92 = tpu.matmul %51, %91, %cst_27 {dimension_numbers = #tpu.dot_dimension_numbers<[1], [0], [0], [1], [0, 0, 1, 1], [], []>} : vector<40x64xbf16>, vector<64x64xbf16>, vector<40x64xf32> -> vector<40x64xf32>
    %93 = arith.truncf %92 : vector<40x64xf32> to vector<40x64xbf16>
    %c0_28 = arith.constant 0 : index
    %c0_29 = arith.constant 0 : index
    %c0_30 = arith.constant 0 : index
    %94 = vector.load %arg9[%c0_28, %c0_29, %c0_30] : memref<2x64x64xbf16, #tpu.memory_space<vmem>>, vector<1x64x64xbf16>
    %95 = vector.shape_cast %94 : vector<1x64x64xbf16> to vector<64x64xbf16>
    %cst_31 = arith.constant dense<0.000000e+00> : vector<40x64xf32>
    %96 = tpu.matmul %93, %95, %cst_31 {dimension_numbers = #tpu.dot_dimension_numbers<[1], [0], [0], [1], [0, 0, 1, 1], [], []>} : vector<40x64xbf16>, vector<64x64xbf16>, vector<40x64xf32> -> vector<40x64xf32>
    %97 = arith.truncf %89 : vector<40x64xf32> to vector<40x64xbf16>
    %c0_32 = arith.constant 0 : index
    %c0_33 = arith.constant 0 : index
    %c0_34 = arith.constant 0 : index
    %98 = vector.load %arg10[%c0_32, %c0_33, %c0_34] : memref<2x64x64xbf16, #tpu.memory_space<vmem>>, vector<1x64x64xbf16>
    %99 = vector.shape_cast %98 : vector<1x64x64xbf16> to vector<64x64xbf16>
    %cst_35 = arith.constant dense<0.000000e+00> : vector<40x64xf32>
    %100 = tpu.matmul %97, %99, %cst_35 {dimension_numbers = #tpu.dot_dimension_numbers<[1], [0], [0], [1], [0, 0, 1, 1], [], []>} : vector<40x64xbf16>, vector<64x64xbf16>, vector<40x64xf32> -> vector<40x64xf32>
    %101 = arith.addf %96, %100 : vector<40x64xf32>
    %102 = arith.negf %101 : vector<40x64xf32>
    %103 = math.exp %102 : vector<40x64xf32>
    %cst_36 = arith.constant 1.000000e+00 : f32
    %104 = vector.broadcast %cst_36 : f32 to vector<40x64xf32>
    %105 = arith.addf %104, %103 : vector<40x64xf32>
    %106 = arith.divf %104, %105 : vector<40x64xf32>
    %107 = arith.mulf %106, %92 : vector<40x64xf32>
    %cst_37 = arith.constant 1.000000e+00 : f32
    %108 = vector.broadcast %cst_37 : f32 to vector<40x64xf32>
    %109 = arith.subf %108, %106 : vector<40x64xf32>
    %110 = arith.mulf %109, %89 : vector<40x64xf32>
    %111 = arith.addf %107, %110 : vector<40x64xf32>
    %112 = arith.truncf %111 : vector<40x64xf32> to vector<40x64xbf16>
    %cst_38 = arith.constant dense<0.000000e+00> : vector<40x64xf32>
    %113 = tpu.matmul %78, %112, %cst_38 {dimension_numbers = #tpu.dot_dimension_numbers<[1], [0], [0], [1], [0, 0, 1, 1], [], []>} : vector<40x40xbf16>, vector<40x64xbf16>, vector<40x64xf32> -> vector<40x64xf32>
    %114 = vector.shape_cast %84 : vector<40x1xi1> to vector<40x1xi1>
    %115 = vector.broadcast %114 : vector<40x1xi1> to vector<40x64xi1>
    %116 = arith.select %115, %111, %92 : vector<40x64xi1>, vector<40x64xf32>
    %117 = arith.addf %116, %113 : vector<40x64xf32>
    %118 = arith.mulf %117, %117 : vector<40x64xf32>
    %cst_39 = arith.constant dense<0.000000e+00> : vector<40xf32>
    %119 = vector.multi_reduction <add>, %118, %cst_39 [1] : vector<40x64xf32> to vector<40xf32>
    %120 = vector.shape_cast %119 : vector<40xf32> to vector<40x1xf32>
    %cst_40 = arith.constant 1.000000e-24 : f32
    %121 = vector.broadcast %cst_40 : f32 to vector<40x1xf32>
    %122 = arith.addf %120, %121 : vector<40x1xf32>
    %123 = math.rsqrt %122 : vector<40x1xf32>
    %124 = vector.broadcast %123 : vector<40x1xf32> to vector<40x64xf32>
    %125 = arith.mulf %117, %124 : vector<40x64xf32>
    %126 = arith.addf %0, %125 : vector<40x64xf32>
    %127 = arith.truncf %125 : vector<40x64xf32> to vector<40x64xbf16>
    %cst_41 = arith.constant dense<0.000000e+00> : vector<104x64xf32>
    %128 = tpu.matmul %36, %127, %cst_41 {dimension_numbers = #tpu.dot_dimension_numbers<[1], [0], [0], [1], [0, 0, 1, 1], [], []>} : vector<104x40xbf16>, vector<40x64xbf16>, vector<104x64xf32> -> vector<104x64xf32>
    %129 = vector.extract_strided_slice %128 {offsets = [0, 0], sizes = [64, 64], strides = [1, 1]} : vector<104x64xf32> to vector<64x64xf32>
    %130 = vector.extract_strided_slice %128 {offsets = [64, 0], sizes = [40, 64], strides = [1, 1]} : vector<104x64xf32> to vector<40x64xf32>
    %131 = arith.mulf %130, %81 : vector<40x64xf32>
    %132 = arith.mulf %129, %60 : vector<64x64xf32>
    %133 = arith.truncf %132 : vector<64x64xf32> to vector<64x64xbf16>
    %cst_42 = arith.constant dense<0.000000e+00> : vector<40x64xf32>
    %134 = tpu.matmul %51, %133, %cst_42 {dimension_numbers = #tpu.dot_dimension_numbers<[1], [0], [0], [1], [0, 0, 1, 1], [], []>} : vector<40x64xbf16>, vector<64x64xbf16>, vector<40x64xf32> -> vector<40x64xf32>
    %135 = arith.truncf %134 : vector<40x64xf32> to vector<40x64xbf16>
    %c1 = arith.constant 1 : index
    %c0_43 = arith.constant 0 : index
    %c0_44 = arith.constant 0 : index
    %136 = vector.load %arg9[%c1, %c0_43, %c0_44] : memref<2x64x64xbf16, #tpu.memory_space<vmem>>, vector<1x64x64xbf16>
    %137 = vector.shape_cast %136 : vector<1x64x64xbf16> to vector<64x64xbf16>
    %cst_45 = arith.constant dense<0.000000e+00> : vector<40x64xf32>
    %138 = tpu.matmul %135, %137, %cst_45 {dimension_numbers = #tpu.dot_dimension_numbers<[1], [0], [0], [1], [0, 0, 1, 1], [], []>} : vector<40x64xbf16>, vector<64x64xbf16>, vector<40x64xf32> -> vector<40x64xf32>
    %139 = arith.truncf %131 : vector<40x64xf32> to vector<40x64xbf16>
    %c1_46 = arith.constant 1 : index
    %c0_47 = arith.constant 0 : index
    %c0_48 = arith.constant 0 : index
    %140 = vector.load %arg10[%c1_46, %c0_47, %c0_48] : memref<2x64x64xbf16, #tpu.memory_space<vmem>>, vector<1x64x64xbf16>
    %141 = vector.shape_cast %140 : vector<1x64x64xbf16> to vector<64x64xbf16>
    %cst_49 = arith.constant dense<0.000000e+00> : vector<40x64xf32>
    %142 = tpu.matmul %139, %141, %cst_49 {dimension_numbers = #tpu.dot_dimension_numbers<[1], [0], [0], [1], [0, 0, 1, 1], [], []>} : vector<40x64xbf16>, vector<64x64xbf16>, vector<40x64xf32> -> vector<40x64xf32>
    %143 = arith.addf %138, %142 : vector<40x64xf32>
    %144 = arith.negf %143 : vector<40x64xf32>
    %145 = math.exp %144 : vector<40x64xf32>
    %cst_50 = arith.constant 1.000000e+00 : f32
    %146 = vector.broadcast %cst_50 : f32 to vector<40x64xf32>
    %147 = arith.addf %146, %145 : vector<40x64xf32>
    %148 = arith.divf %146, %147 : vector<40x64xf32>
    %149 = arith.mulf %148, %134 : vector<40x64xf32>
    %cst_51 = arith.constant 1.000000e+00 : f32
    %150 = vector.broadcast %cst_51 : f32 to vector<40x64xf32>
    %151 = arith.subf %150, %148 : vector<40x64xf32>
    %152 = arith.mulf %151, %131 : vector<40x64xf32>
    %153 = arith.addf %149, %152 : vector<40x64xf32>
    %154 = arith.truncf %153 : vector<40x64xf32> to vector<40x64xbf16>
    %cst_52 = arith.constant dense<0.000000e+00> : vector<40x64xf32>
    %155 = tpu.matmul %78, %154, %cst_52 {dimension_numbers = #tpu.dot_dimension_numbers<[1], [0], [0], [1], [0, 0, 1, 1], [], []>} : vector<40x40xbf16>, vector<40x64xbf16>, vector<40x64xf32> -> vector<40x64xf32>
    %156 = vector.shape_cast %84 : vector<40x1xi1> to vector<40x1xi1>
    %157 = vector.broadcast %156 : vector<40x1xi1> to vector<40x64xi1>
    %158 = arith.select %157, %153, %134 : vector<40x64xi1>, vector<40x64xf32>
    %159 = arith.addf %158, %155 : vector<40x64xf32>
    %160 = arith.mulf %159, %159 : vector<40x64xf32>
    %cst_53 = arith.constant dense<0.000000e+00> : vector<40xf32>
    %161 = vector.multi_reduction <add>, %160, %cst_53 [1] : vector<40x64xf32> to vector<40xf32>
    %162 = vector.shape_cast %161 : vector<40xf32> to vector<40x1xf32>
    %cst_54 = arith.constant 1.000000e-24 : f32
    %163 = vector.broadcast %cst_54 : f32 to vector<40x1xf32>
    %164 = arith.addf %162, %163 : vector<40x1xf32>
    %165 = math.rsqrt %164 : vector<40x1xf32>
    %166 = vector.broadcast %165 : vector<40x1xf32> to vector<40x64xf32>
    %167 = arith.mulf %159, %166 : vector<40x64xf32>
    %168 = arith.addf %126, %167 : vector<40x64xf32>
    %c0_55 = arith.constant 0 : index
    %c0_56 = arith.constant 0 : index
    %169 = vector.load %arg11[%c0_55, %c0_56] : memref<24x1xi32, #tpu.memory_space<vmem>>, vector<24x1xi32>
    %170 = tpu.iota {dimensions = array<i32: 1>} : vector<24x40xi32>
    %171 = vector.broadcast %169 : vector<24x1xi32> to vector<24x40xi32>
    %172 = arith.cmpi eq, %170, %171 : vector<24x40xi32>
    %173 = arith.extui %172 : vector<24x40xi1> to vector<24x40xi32>
    %174 = arith.sitofp %173 : vector<24x40xi32> to vector<24x40xf32>
    %175 = arith.truncf %174 : vector<24x40xf32> to vector<24x40xbf16>
    %176 = arith.truncf %168 : vector<40x64xf32> to vector<40x64xbf16>
    %cst_57 = arith.constant dense<0.000000e+00> : vector<24x64xf32>
    %177 = tpu.matmul %175, %176, %cst_57 {dimension_numbers = #tpu.dot_dimension_numbers<[1], [0], [0], [1], [0, 0, 1, 1], [], []>} : vector<24x40xbf16>, vector<40x64xbf16>, vector<24x64xf32> -> vector<24x64xf32>
    %178 = vector.extract_strided_slice %177 {offsets = [0, 0], sizes = [8, 64], strides = [1, 1]} : vector<24x64xf32> to vector<8x64xf32>
    %179 = vector.extract_strided_slice %177 {offsets = [8, 0], sizes = [8, 64], strides = [1, 1]} : vector<24x64xf32> to vector<8x64xf32>
    %180 = vector.extract_strided_slice %177 {offsets = [16, 0], sizes = [8, 64], strides = [1, 1]} : vector<24x64xf32> to vector<8x64xf32>
    %181 = arith.mulf %178, %179 : vector<8x64xf32>
    %cst_58 = arith.constant dense<0.000000e+00> : vector<8xf32>
    %182 = vector.multi_reduction <add>, %181, %cst_58 [1] : vector<8x64xf32> to vector<8xf32>
    %183 = vector.shape_cast %182 : vector<8xf32> to vector<8x1xf32>
    %184 = arith.mulf %178, %180 : vector<8x64xf32>
    %cst_59 = arith.constant dense<0.000000e+00> : vector<8xf32>
    %185 = vector.multi_reduction <add>, %184, %cst_59 [1] : vector<8x64xf32> to vector<8xf32>
    %186 = vector.shape_cast %185 : vector<8xf32> to vector<8x1xf32>
    %187 = arith.subf %183, %186 : vector<8x1xf32>
    %cst_60 = arith.constant 0.000000e+00 : f32
    %188 = vector.broadcast %cst_60 : f32 to vector<8x1xf32>
    %189 = arith.subf %188, %187 : vector<8x1xf32>
    %cst_61 = arith.constant 0.000000e+00 : f32
    %190 = vector.broadcast %cst_61 : f32 to vector<8x1xf32>
    %191 = arith.maximumf %189, %190 : vector<8x1xf32>
    %192 = math.absf %187 : vector<8x1xf32>
    %cst_62 = arith.constant 0.000000e+00 : f32
    %193 = vector.broadcast %cst_62 : f32 to vector<8x1xf32>
    %194 = arith.subf %193, %192 : vector<8x1xf32>
    %195 = math.exp %194 : vector<8x1xf32>
    %cst_63 = arith.constant 1.000000e+00 : f32
    %196 = vector.broadcast %cst_63 : f32 to vector<8x1xf32>
    %197 = arith.addf %196, %195 : vector<8x1xf32>
    %198 = math.log %197 : vector<8x1xf32>
    %199 = arith.addf %191, %198 : vector<8x1xf32>
    %cst_64 = arith.constant 0.000000e+00 : f32
    %200 = vector.broadcast %cst_64 : f32 to vector<8x1xf32>
    %201 = arith.subf %200, %199 : vector<8x1xf32>
    %202 = vector.shape_cast %201 : vector<8x1xf32> to vector<1x8x1xf32>
    %cst_65 = arith.constant dense<0.000000e+00> : vector<1xf32>
    %203 = vector.multi_reduction <add>, %202, %cst_65 [1, 2] : vector<1x8x1xf32> to vector<1xf32>
    %204 = vector.shape_cast %203 : vector<1xf32> to vector<1x1x1xf32>
    %205 = vector.extract %204[0, 0, 0] : f32 from vector<1x1x1xf32>
    %cst_66 = arith.constant 8.000000e+00 : f32
    %206 = arith.divf %205, %cst_66 : f32
    %cst_67 = arith.constant 0.000000e+00 : f32
    %207 = arith.subf %cst_67, %206 : f32
    %208 = arith.mulf %177, %177 : vector<24x64xf32>
    %209 = vector.shape_cast %208 : vector<24x64xf32> to vector<1x24x64xf32>
    %cst_68 = arith.constant dense<0.000000e+00> : vector<1xf32>
    %210 = vector.multi_reduction <add>, %209, %cst_68 [1, 2] : vector<1x24x64xf32> to vector<1xf32>
    %211 = vector.shape_cast %210 : vector<1xf32> to vector<1x1x1xf32>
    %212 = vector.extract %211[0, 0, 0] : f32 from vector<1x1x1xf32>
    %cst_69 = arith.constant 5.000000e-01 : f32
    %213 = arith.mulf %cst_69, %212 : f32
    %cst_70 = arith.constant 9.99999974E-5 : f32
    %214 = arith.mulf %cst_70, %213 : f32
    %cst_71 = arith.constant 8.000000e+00 : f32
    %215 = arith.divf %214, %cst_71 : f32
    %216 = arith.addf %207, %215 : f32
    %217 = vector.broadcast %216 : f32 to vector<1x1xf32>
    %c0_72 = arith.constant 0 : index
    %c0_73 = arith.constant 0 : index
    %218 = vector.load %arg12[%c0_72, %c0_73] : memref<1x1xf32, #tpu.memory_space<vmem>>, vector<1x1xf32>
    tpu.vector_store %arg12[%c0_72, %c0_73], %217 {strides = array<i32>} : memref<1x1xf32, #tpu.memory_space<vmem>>, vector<1x1xf32>,
    %c0_74 = arith.constant 0 : index
    %c0_75 = arith.constant 0 : index
    %219 = vector.load %arg13[%c0_74, %c0_75] : memref<40x64xf32, #tpu.memory_space<vmem>>, vector<40x64xf32>
    tpu.vector_store %arg13[%c0_74, %c0_75], %168 {strides = array<i32>} : memref<40x64xf32, #tpu.memory_space<vmem>>, vector<40x64xf32>,
    return
  }
}

</mosaic_0001>

<llo_original>
// kernel: tpu_custom_call.1
$region0: #{tpu_custom_call.1}
  #allocation0 [shape = 'u32[]', space=smem, size = 0x4, offset = 0x4, fixed_abs, tag = 'smem constant byte address 0x4 - core index']
  #allocation1 [shape = 'u32[144,128]{1,0:T(1,128)}', space=vmem, size = 0x12000, scoped, tag = 'internal scratch']
  %s0 = inlined_call_operand.vmem [shape: f32[40,64], index: 0, kind: input, shape index: {}]
  %s1 = inlined_call_operand.vmem [shape: f32[8,64], index: 1, kind: input, shape index: {}]
  %s2 = inlined_call_operand.vmem [shape: s32[104,1], index: 2, kind: input, shape index: {}]
  %s3 = inlined_call_operand.vmem [shape: s32[64,1], index: 3, kind: input, shape index: {}]
  %s4 = inlined_call_operand.vmem [shape: s32[1,64], index: 4, kind: input, shape index: {}]
  %s5 = inlined_call_operand.vmem [shape: s32[32,1], index: 5, kind: input, shape index: {}]
  %s6 = inlined_call_operand.vmem [shape: s32[1,32], index: 6, kind: input, shape index: {}]
  %s7 = inlined_call_operand.vmem [shape: s32[32,1], index: 7, kind: input, shape index: {}]
  %s8 = inlined_call_operand.vmem [shape: s32[1,32], index: 8, kind: input, shape index: {}]
  %s9 = inlined_call_operand.vmem [shape: bf16[2,64,64], index: 9, kind: input, shape index: {}]
  %s10 = inlined_call_operand.vmem [shape: bf16[2,64,64], index: 10, kind: input, shape index: {}]
  %s11 = inlined_call_operand.vmem [shape: s32[24,1], index: 11, kind: input, shape index: {}]
  %s12 = inlined_call_operand.hbm [shape: f32[1,1], index: 12, kind: output, shape index: {0}]
  %s13 = inlined_call_operand.hbm [shape: f32[40,64], index: 13, kind: output, shape index: {1}]
  %14 = xla_tuple %s12, %s13
  %s15 = sld [smem:[#allocation0]]
  $region66: #{tpu_custom_call.1} parent=0
    _
  %s17 = ssub.s32 1, %s15
  %s18 = scalar_select 0, %s17, %s15
  $region1: #{tpu_custom_call.1} parent=0
    #allocation2 [shape = 'u8[512]{0}', space=vmem, size = 0x400, scoped, tag = 'output window, operand 0, single buffered']
    #allocation3 [shape = 's32[1]{0}', space=sflag, size = 0x4, scoped, tag = 'scoped memory for tpu_custom_call.1']
    #allocation4 [shape = 'u8[20480]{0}', space=vmem, size = 0x5000, scoped, tag = 'output window, operand 1, single buffered']
    #allocation5 [shape = 's32[1]{0}', space=sflag, size = 0x4, scoped, tag = 'scoped memory for tpu_custom_call.1']
    %19 = vsyncpa [#allocation3], 0
    %20 = vsyncpa [#allocation5], 0
    // Predicated region
    $region2: #{tpu_custom_call.1} parent=1 // pred_check
      _
    $region3: #{tpu_custom_call.1} parent=1 // pred_check_branch
      %22 = sbr.rel (0) target = $region5
    $region4: #{tpu_custom_call.1} parent=1 // pred_region
      _
    $region5: #{tpu_custom_call.1} parent=1 // pred_fallthru
      _
    // Predicated region
    $region6: #{tpu_custom_call.1} parent=1 // pred_check
      _
    $region7: #{tpu_custom_call.1} parent=1 // pred_check_branch
      %24 = sbr.rel (0) target = $region9
    $region8: #{tpu_custom_call.1} parent=1 // pred_region
      _
    $region9: #{tpu_custom_call.1} parent=1 // pred_fallthru
      _
    // Predicated region
    $region10: #{tpu_custom_call.1} parent=1 // pred_check
      _
    $region11: #{tpu_custom_call.1} parent=1 // pred_check_branch
      %26 = sbr.rel (0) target = $region13
    $region12: #{tpu_custom_call.1} parent=1 // pred_region
      _
    $region13: #{tpu_custom_call.1} parent=1 // pred_fallthru
      _
    // Predicated region
    $region14: #{tpu_custom_call.1} parent=1 // pred_check
      _
    $region15: #{tpu_custom_call.1} parent=1 // pred_check_branch
      %28 = sbr.rel (0) target = $region17
    $region16: #{tpu_custom_call.1} parent=1 // pred_region
      _
    $region17: #{tpu_custom_call.1} parent=1 // pred_fallthru
      _
    // Predicated region
    $region18: #{tpu_custom_call.1} parent=1 // pred_check
      _
    $region19: #{tpu_custom_call.1} parent=1 // pred_check_branch
      %30 = sbr.rel (0) target = $region21
    $region20: #{tpu_custom_call.1} parent=1 // pred_region
      _
    $region21: #{tpu_custom_call.1} parent=1 // pred_fallthru
      _
    // Predicated region
    $region22: #{tpu_custom_call.1} parent=1 // pred_check
      _
    $region23: #{tpu_custom_call.1} parent=1 // pred_check_branch
      %32 = sbr.rel (0) target = $region25
    $region24: #{tpu_custom_call.1} parent=1 // pred_region
      _
    $region25: #{tpu_custom_call.1} parent=1 // pred_fallthru
      _
    // Predicated region
    $region26: #{tpu_custom_call.1} parent=1 // pred_check
      _
    $region27: #{tpu_custom_call.1} parent=1 // pred_check_branch
      %34 = sbr.rel (0) target = $region29
    $region28: #{tpu_custom_call.1} parent=1 // pred_region
      _
    $region29: #{tpu_custom_call.1} parent=1 // pred_fallthru
      _
    // Predicated region
    $region30: #{tpu_custom_call.1} parent=1 // pred_check
      _
    $region31: #{tpu_custom_call.1} parent=1 // pred_check_branch
      %36 = sbr.rel (0) target = $region33
    $region32: #{tpu_custom_call.1} parent=1 // pred_region
      _
    $region33: #{tpu_custom_call.1} parent=1 // pred_fallthru
      _
    // Predicated region
    $region34: #{tpu_custom_call.1} parent=1 // pred_check
      _
    $region35: #{tpu_custom_call.1} parent=1 // pred_check_branch
      %38 = sbr.rel (0) target = $region37
    $region36: #{tpu_custom_call.1} parent=1 // pred_region
      _
    $region37: #{tpu_custom_call.1} parent=1 // pred_fallthru
      _
    // Predicated region
    $region38: #{tpu_custom_call.1} parent=1 // pred_check
      _
    $region39: #{tpu_custom_call.1} parent=1 // pred_check_branch
      %40 = sbr.rel (0) target = $region41
    $region40: #{tpu_custom_call.1} parent=1 // pred_region
      _
    $region41: #{tpu_custom_call.1} parent=1 // pred_fallthru
      _
    // Predicated region
    $region42: #{tpu_custom_call.1} parent=1 // pred_check
      _
    $region43: #{tpu_custom_call.1} parent=1 // pred_check_branch
      %42 = sbr.rel (0) target = $region45
    $region44: #{tpu_custom_call.1} parent=1 // pred_region
      _
    $region45: #{tpu_custom_call.1} parent=1 // pred_fallthru
      _
    // Predicated region
    $region46: #{tpu_custom_call.1} parent=1 // pred_check
      _
    $region47: #{tpu_custom_call.1} parent=1 // pred_check_branch
      %44 = sbr.rel (0) target = $region49
    $region48: #{tpu_custom_call.1} parent=1 // pred_region
      _
    $region49: #{tpu_custom_call.1} parent=1 // pred_fallthru
      _
    %v46 = vld [vmem:[%s0] sm:$0xff]
    %v47 = vld [vmem:[%s0 + $0x8] sm:$0xff]
    %v48 = vld [vmem:[%s0 + $0x10] sm:$0xff]
    %v49 = vld [vmem:[%s0 + $0x18] sm:$0xff]
    %v50 = vld [vmem:[%s0 + $0x20] sm:$0xff]
    %v51 = vld [vmem:[%s1] sm:$0xff]
    %v52 = vld [vmem:[%s2] sm:$0xff]
    %v53 = vld [vmem:[%s2 + $0x8] sm:$0xff]
    %v54 = vld [vmem:[%s2 + $0x10] sm:$0xff]
    %v55 = vld [vmem:[%s2 + $0x18] sm:$0xff]
    %v56 = vld [vmem:[%s2 + $0x20] sm:$0xff]
    %v57 = vld [vmem:[%s2 + $0x28] sm:$0xff]
    %v58 = vld [vmem:[%s2 + $0x30] sm:$0xff]
    %v59 = vld [vmem:[%s2 + $0x38] sm:$0xff]
    %v60 = vld [vmem:[%s2 + $0x40] sm:$0xff]
    %v61 = vld [vmem:[%s2 + $0x48] sm:$0xff]
    %v62 = vld [vmem:[%s2 + $0x50] sm:$0xff]
    %v63 = vld [vmem:[%s2 + $0x58] sm:$0xff]
    %v64 = vld [vmem:[%s2 + $0x60] sm:$0xff]
    %v65 = vlaneseq
    %v66 = vand.u32 %v65, 127
    %67 = vset.pattern.permute.xlu0 0
    %68 = vperm.xlu0 %67, %v52
    %v69 = vpop.permute.xlu0 %68
    %70 = vset.pattern.permute.xlu0 0
    %71 = vperm.xlu0 %70, %v53
    %v72 = vpop.permute.xlu0 %71
    %73 = vset.pattern.permute.xlu0 0
    %74 = vperm.xlu0 %73, %v54
    %v75 = vpop.permute.xlu0 %74
    %76 = vset.pattern.permute.xlu0 0
    %77 = vperm.xlu0 %76, %v55
    %v78 = vpop.permute.xlu0 %77
    %79 = vset.pattern.permute.xlu0 0
    %80 = vperm.xlu0 %79, %v56
    %v81 = vpop.permute.xlu0 %80
    %82 = vset.pattern.permute.xlu0 0
    %83 = vperm.xlu0 %82, %v57
    %v84 = vpop.permute.xlu0 %83
    %85 = vset.pattern.permute.xlu0 0
    %86 = vperm.xlu0 %85, %v58
    %v87 = vpop.permute.xlu0 %86
    %88 = vset.pattern.permute.xlu0 0
    %89 = vperm.xlu0 %88, %v59
    %v90 = vpop.permute.xlu0 %89
    %91 = vset.pattern.permute.xlu0 0
    %92 = vperm.xlu0 %91, %v60
    %v93 = vpop.permute.xlu0 %92
    %94 = vset.pattern.permute.xlu0 0
    %95 = vperm.xlu0 %94, %v61
    %v96 = vpop.permute.xlu0 %95
    %97 = vset.pattern.permute.xlu0 0
    %98 = vperm.xlu0 %97, %v62
    %v99 = vpop.permute.xlu0 %98
    %100 = vset.pattern.permute.xlu0 0
    %101 = vperm.xlu0 %100, %v63
    %v102 = vpop.permute.xlu0 %101
    %103 = vset.pattern.permute.xlu0 0
    %104 = vperm.xlu0 %103, %v64
    %v105 = vpop.permute.xlu0 %104
    %vm106 = vcmp.eq.s32.totalorder %v66, %v69
    %vm107 = vcmp.eq.s32.totalorder %v66, %v72
    %vm108 = vcmp.eq.s32.totalorder %v66, %v75
    %vm109 = vcmp.eq.s32.totalorder %v66, %v78
    %vm110 = vcmp.eq.s32.totalorder %v66, %v81
    %vm111 = vcmp.eq.s32.totalorder %v66, %v84
    %vm112 = vcmp.eq.s32.totalorder %v66, %v87
    %vm113 = vcmp.eq.s32.totalorder %v66, %v90
    %vm114 = vcmp.eq.s32.totalorder %v66, %v93
    %vm115 = vcmp.eq.s32.totalorder %v66, %v96
    %vm116 = vcmp.eq.s32.totalorder %v66, %v99
    %vm117 = vcmp.eq.s32.totalorder %v66, %v102
    %vm118 = vcmp.eq.s32.totalorder %v66, %v105
    %v119 = vsel %vm106, 1, 0
    %v120 = vsel %vm107, 1, 0
    %v121 = vsel %vm108, 1, 0
    %v122 = vsel %vm109, 1, 0
    %v123 = vsel %vm110, 1, 0
    %v124 = vsel %vm111, 1, 0
    %v125 = vsel %vm112, 1, 0
    %v126 = vsel %vm113, 1, 0
    %v127 = vsel %vm114, 1, 0
    %v128 = vsel %vm115, 1, 0
    %v129 = vsel %vm116, 1, 0
    %v130 = vsel %vm117, 1, 0
    %v131 = vsel %vm118, 1, 0
    %v132 = vcvt.s32.f32 %v119
    %v133 = vcvt.s32.f32 %v120
    %v134 = vcvt.s32.f32 %v121
    %v135 = vcvt.s32.f32 %v122
    %v136 = vcvt.s32.f32 %v123
    %v137 = vcvt.s32.f32 %v124
    %v138 = vcvt.s32.f32 %v125
    %v139 = vcvt.s32.f32 %v126
    %v140 = vcvt.s32.f32 %v127
    %v141 = vcvt.s32.f32 %v128
    %v142 = vcvt.s32.f32 %v129
    %v143 = vcvt.s32.f32 %v130
    %v144 = vcvt.s32.f32 %v131
    %v145 = vlaneseq
    %v146 = vshrl.u32 %v145, 7
    %v147 = vadd.s32 %v146, 8
    %v148 = vadd.s32 %v146, 16
    %v149 = vadd.s32 %v146, 24
    %v150 = vadd.s32 %v146, 32
    %v151 = vadd.s32 %v146, 40
    %v152 = vadd.s32 %v146, 48
    %v153 = vadd.s32 %v146, 56
    %v154 = vadd.s32 %v146, 64
    %v155 = vadd.s32 %v146, 72
    %v156 = vadd.s32 %v146, 80
    %v157 = vadd.s32 %v146, 88
    %v158 = vadd.s32 %v146, 96
    %v159 = vld [vmem:[%s8] sm:$0x1]
    %v160 = vadd.s32 %v159, 64
    %v161 = vlaneseq
    %v162 = vshrl.u32 %v161, 7
    %v163 = vsub.s32 0, %v162
    %v164 = vrot.slane %v160, %v163
    %vm165 = vcmp.eq.s32.totalorder %v146, %v164
    %vm166 = vcmp.eq.s32.totalorder %v147, %v164
    %vm167 = vcmp.eq.s32.totalorder %v148, %v164
    %vm168 = vcmp.eq.s32.totalorder %v149, %v164
    %vm169 = vcmp.eq.s32.totalorder %v150, %v164
    %vm170 = vcmp.eq.s32.totalorder %v151, %v164
    %vm171 = vcmp.eq.s32.totalorder %v152, %v164
    %vm172 = vcmp.eq.s32.totalorder %v153, %v164
    %vm173 = vcmp.eq.s32.totalorder %v154, %v164
    %vm174 = vcmp.eq.s32.totalorder %v155, %v164
    %vm175 = vcmp.eq.s32.totalorder %v156, %v164
    %vm176 = vcmp.eq.s32.totalorder %v157, %v164
    %vm177 = vcmp.eq.s32.totalorder %v158, %v164
    %v178 = vsel %vm165, 1, 0
    %v179 = vsel %vm166, 1, 0
    %v180 = vsel %vm167, 1, 0
    %v181 = vsel %vm168, 1, 0
    %v182 = vsel %vm169, 1, 0
    %v183 = vsel %vm170, 1, 0
    %v184 = vsel %vm171, 1, 0
    %v185 = vsel %vm172, 1, 0
    %v186 = vsel %vm173, 1, 0
    %v187 = vsel %vm174, 1, 0
    %v188 = vsel %vm175, 1, 0
    %v189 = vsel %vm176, 1, 0
    %v190 = vsel %vm177, 1, 0
    %v191 = vcvt.s32.f32 %v178
    %v192 = vcvt.s32.f32 %v179
    %v193 = vcvt.s32.f32 %v180
    %v194 = vcvt.s32.f32 %v181
    %v195 = vcvt.s32.f32 %v182
    %v196 = vcvt.s32.f32 %v183
    %v197 = vcvt.s32.f32 %v184
    %v198 = vcvt.s32.f32 %v185
    %v199 = vcvt.s32.f32 %v186
    %v200 = vcvt.s32.f32 %v187
    %v201 = vcvt.s32.f32 %v188
    %v202 = vcvt.s32.f32 %v189
    %v203 = vcvt.s32.f32 %v190
    %vm204 = vcmask 261120
    %v205 = vsel %vm204, %v191, 0.0
    %206 = vadd.xlane.f32.xlu0 %v205
    %v207 = vpop.xlane.xlu0 %206
    %v208 = vsel %vm204, %v192, 0.0
    %209 = vadd.xlane.f32.xlu0 %v208
    %v210 = vpop.xlane.xlu0 %209
    %v211 = vsel %vm204, %v193, 0.0
    %212 = vadd.xlane.f32.xlu0 %v211
    %v213 = vpop.xlane.xlu0 %212
    %v214 = vsel %vm204, %v194, 0.0
    %215 = vadd.xlane.f32.xlu0 %v214
    %v216 = vpop.xlane.xlu0 %215
    %v217 = vsel %vm204, %v195, 0.0
    %218 = vadd.xlane.f32.xlu0 %v217
    %v219 = vpop.xlane.xlu0 %218
    %v220 = vsel %vm204, %v196, 0.0
    %221 = vadd.xlane.f32.xlu0 %v220
    %v222 = vpop.xlane.xlu0 %221
    %v223 = vsel %vm204, %v197, 0.0
    %224 = vadd.xlane.f32.xlu0 %v223
    %v225 = vpop.xlane.xlu0 %224
    %v226 = vsel %vm204, %v198, 0.0
    %227 = vadd.xlane.f32.xlu0 %v226
    %v228 = vpop.xlane.xlu0 %227
    %v229 = vsel %vm204, %v199, 0.0
    %230 = vadd.xlane.f32.xlu0 %v229
    %v231 = vpop.xlane.xlu0 %230
    %v232 = vsel %vm204, %v200, 0.0
    %233 = vadd.xlane.f32.xlu0 %v232
    %v234 = vpop.xlane.xlu0 %233
    %v235 = vsel %vm204, %v201, 0.0
    %236 = vadd.xlane.f32.xlu0 %v235
    %v237 = vpop.xlane.xlu0 %236
    %v238 = vsel %vm204, %v202, 0.0
    %239 = vadd.xlane.f32.xlu0 %v238
    %v240 = vpop.xlane.xlu0 %239
    %v241 = vsel %vm204, %v203, 0.0
    %242 = vadd.xlane.f32.xlu0 %v241
    %v243 = vpop.xlane.xlu0 %242
    %v244 = vmax.f32 %v207, 1.0
    %v245 = vmax.f32 %v210, 1.0
    %v246 = vmax.f32 %v213, 1.0
    %v247 = vmax.f32 %v216, 1.0
    %v248 = vmax.f32 %v219, 1.0
    %v249 = vmax.f32 %v222, 1.0
    %v250 = vmax.f32 %v225, 1.0
    %v251 = vmax.f32 %v228, 1.0
    %v252 = vmax.f32 %v231, 1.0
    %v253 = vmax.f32 %v234, 1.0
    %v254 = vmax.f32 %v237, 1.0
    %v255 = vmax.f32 %v240, 1.0
    %v256 = vmax.f32 %v243, 1.0
    %v257 = vrcp.pop %v244
    %v258 = vmul.f32 1.0, %v257
    %v259 = vrcp.pop %v245
    %v260 = vmul.f32 1.0, %v259
    %v261 = vrcp.pop %v246
    %v262 = vmul.f32 1.0, %v261
    %v263 = vrcp.pop %v247
    %v264 = vmul.f32 1.0, %v263
    %v265 = vrcp.pop %v248
    %v266 = vmul.f32 1.0, %v265
    %v267 = vrcp.pop %v249
    %v268 = vmul.f32 1.0, %v267
    %v269 = vrcp.pop %v250
    %v270 = vmul.f32 1.0, %v269
    %v271 = vrcp.pop %v251
    %v272 = vmul.f32 1.0, %v271
    %v273 = vrcp.pop %v252
    %v274 = vmul.f32 1.0, %v273
    %v275 = vrcp.pop %v253
    %v276 = vmul.f32 1.0, %v275
    %v277 = vrcp.pop %v254
    %v278 = vmul.f32 1.0, %v277
    %v279 = vrcp.pop %v255
    %v280 = vmul.f32 1.0, %v279
    %v281 = vrcp.pop %v256
    %v282 = vmul.f32 1.0, %v281
    %v283 = vmul.f32 %v191, %v258
    %v284 = vmul.f32 %v192, %v260
    %v285 = vmul.f32 %v193, %v262
    %v286 = vmul.f32 %v194, %v264
    %v287 = vmul.f32 %v195, %v266
    %v288 = vmul.f32 %v196, %v268
    %v289 = vmul.f32 %v197, %v270
    %v290 = vmul.f32 %v198, %v272
    %v291 = vmul.f32 %v199, %v274
    %v292 = vmul.f32 %v200, %v276
    %v293 = vmul.f32 %v201, %v278
    %v294 = vmul.f32 %v202, %v280
    %v295 = vmul.f32 %v203, %v282
    %v296 = vpack.c.bf16 %v284, %v283
    %v297 = vpack.c.bf16 %v286, %v285
    %v298 = vpack.c.bf16 %v288, %v287
    %v299 = vpack.c.bf16 %v290, %v289
    %v300 = vpack.c.bf16 %v292, %v291
    %v301 = vpack.c.bf16 %v294, %v293
    %v302 = vpack.c.bf16 %v295, %v295
    %v303 = vld [vmem:[%s5] sm:$0xff]
    %v304 = vld [vmem:[%s5 + $0x8] sm:$0xff]
    %v305 = vld [vmem:[%s5 + $0x10] sm:$0xff]
    %v306 = vld [vmem:[%s5 + $0x18] sm:$0xff]
    %v307 = vadd.s32 %v303, 32
    %v308 = vadd.s32 %v304, 32
    %v309 = vadd.s32 %v305, 32
    %v310 = vadd.s32 %v306, 32
    %311 = vset.pattern.permute.xlu0 0
    %312 = vperm.xlu0 %311, %v307
    %v313 = vpop.permute.xlu0 %312
    %314 = vset.pattern.permute.xlu0 0
    %315 = vperm.xlu0 %314, %v308
    %v316 = vpop.permute.xlu0 %315
    %317 = vset.pattern.permute.xlu0 0
    %318 = vperm.xlu0 %317, %v309
    %v319 = vpop.permute.xlu0 %318
    %320 = vset.pattern.permute.xlu0 0
    %321 = vperm.xlu0 %320, %v310
    %v322 = vpop.permute.xlu0 %321
    %vm323 = vcmp.eq.s32.totalorder %v66, %v313
    %vm324 = vcmp.eq.s32.totalorder %v66, %v316
    %vm325 = vcmp.eq.s32.totalorder %v66, %v319
    %vm326 = vcmp.eq.s32.totalorder %v66, %v322
    %v327 = vsel %vm323, 1, 0
    %v328 = vsel %vm324, 1, 0
    %v329 = vsel %vm325, 1, 0
    %v330 = vsel %vm326, 1, 0
    %v331 = vcvt.s32.f32 %v327
    %v332 = vcvt.s32.f32 %v328
    %v333 = vcvt.s32.f32 %v329
    %v334 = vcvt.s32.f32 %v330
    %v335 = vpack.c.bf16 %v332, %v331
    %v336 = vpack.c.bf16 %v334, %v333
    %v338 = vsel %vm204, %v296, 0
    %v341 = vsel %vm204, %v297, 0
    %v344 = vsel %vm204, %v298, 0
    %v347 = vsel %vm204, %v299, 0
    %v350 = vsel %vm204, %v300, 0
    %v353 = vsel %vm204, %v301, 0
    %v356 = vsel %vm204, %v302, 0
    %358 = vmatprep.subr.bf16.mxu0 0
    %359 = vmatpush1.bf16.msra.mxu0 0
    %360 = vmatprep.subr.bf16.mxu0 0
    %361 = vmatpush1.bf16.msra.mxu0 0
    %362 = vmatprep.subr.bf16.mxu0 0
    %363 = vmatpush1.bf16.msra.mxu0 0
    %364 = vmatprep.subr.bf16.mxu0 0
    %365 = vmatpush1.bf16.msra.mxu0 0
    %366 = vmatprep.subr.bf16.mxu0 0
    %367 = vmatpush1.bf16.msra.mxu0 0
    %368 = vmatprep.subr.bf16.mxu0 0
    %369 = vmatpush1.bf16.msra.mxu0 0
    %370 = vmatprep.subr.bf16.mxu0 0
    %371 = vmatpush1.bf16.msra.mxu0 %v336
    %372 = vmatprep.subr.bf16.mxu0 0
    %373 = vmatpush1.bf16.msra.mxu0 %v335
    %374 = vmatprep.subr.bf16.mxu0 0
    %375 = vmatpush2.bf16.msra.mxu0 0
    %376 = vmatprep.subr.bf16.mxu0 0
    %377 = vmatpush2.bf16.msra.mxu0 0
    %378 = vmatprep.subr.bf16.mxu0 0
    %379 = vmatpush2.bf16.msra.mxu0 0
    %380 = vmatprep.subr.bf16.mxu0 0
    %381 = vmatpush2.bf16.msra.mxu0 0
    %382 = vmatprep.subr.bf16.mxu0 0
    %383 = vmatpush2.bf16.msra.mxu0 0
    %384 = vmatprep.subr.bf16.mxu0 0
    %385 = vmatpush2.bf16.msra.mxu0 0
    %386 = vmatprep.subr.bf16.mxu0 0
    %387 = vmatpush2.bf16.msra.mxu0 0
    %388 = vmatprep.subr.bf16.mxu0 0
    %389 = vmatpush2.bf16.msra.mxu0 0
    %390 = vmatprep.mubr.bf16.mxu0 0
    %391 = vmatmul.mubr.bf16.gmra.mxu0 %v338
    %v392 = vpop.f32.mrf.mxu0
    %v393 = vadd.f32 0.0, %v392
    %v394 = vpop.f32.mrf.mxu0
    %v395 = vpop.f32.mrf.mxu0
    %v396 = vadd.f32 0.0, %v395
    %v397 = vpop.f32.mrf.mxu0
    %398 = vmatprep.mubr.bf16.mxu0 0
    %399 = vmatmul.mubr.bf16.gmra.mxu0 %v341
    %v400 = vpop.f32.mrf.mxu0
    %v401 = vadd.f32 0.0, %v400
    %v402 = vpop.f32.mrf.mxu0
    %v403 = vpop.f32.mrf.mxu0
    %v404 = vadd.f32 0.0, %v403
    %v405 = vpop.f32.mrf.mxu0
    %406 = vmatprep.mubr.bf16.mxu0 0
    %407 = vmatmul.mubr.bf16.gmra.mxu0 %v344
    %v408 = vpop.f32.mrf.mxu0
    %v409 = vadd.f32 0.0, %v408
    %v410 = vpop.f32.mrf.mxu0
    %v411 = vpop.f32.mrf.mxu0
    %v412 = vadd.f32 0.0, %v411
    %v413 = vpop.f32.mrf.mxu0
    %414 = vmatprep.mubr.bf16.mxu0 0
    %415 = vmatmul.mubr.bf16.gmra.mxu0 %v347
    %v416 = vpop.f32.mrf.mxu0
    %v417 = vadd.f32 0.0, %v416
    %v418 = vpop.f32.mrf.mxu0
    %v419 = vpop.f32.mrf.mxu0
    %v420 = vadd.f32 0.0, %v419
    %v421 = vpop.f32.mrf.mxu0
    %422 = vmatprep.mubr.bf16.mxu0 0
    %423 = vmatmul.mubr.bf16.gmra.mxu0 %v350
    %v424 = vpop.f32.mrf.mxu0
    %v425 = vadd.f32 0.0, %v424
    %v426 = vpop.f32.mrf.mxu0
    %v427 = vpop.f32.mrf.mxu0
    %v428 = vadd.f32 0.0, %v427
    %v429 = vpop.f32.mrf.mxu0
    %430 = vmatprep.mubr.bf16.mxu0 0
    %431 = vmatmul.mubr.bf16.gmra.mxu0 %v353
    %v432 = vpop.f32.mrf.mxu0
    %v433 = vadd.f32 0.0, %v432
    %v434 = vpop.f32.mrf.mxu0
    %v435 = vpop.f32.mrf.mxu0
    %v436 = vadd.f32 0.0, %v435
    %v437 = vpop.f32.mrf.mxu0
    %438 = vmatprep.mubr.bf16.mxu0 0
    %439 = vmatmul.mubr.bf16.gmra.mxu0 %v356
    %v440 = vpop.f32.mrf.mxu0
    %v441 = vadd.f32 0.0, %v440
    %v442 = vpop.f32.mrf.mxu0
    %v443 = vpop.f32.mrf.mxu0
    %v444 = vpop.f32.mrf.mxu0
    %445 = vdwg.mxu0
    %v446 = vadd.f32 %v132, %v393
    %v447 = vadd.f32 %v133, %v396
    %v448 = vadd.f32 %v134, %v401
    %v449 = vadd.f32 %v135, %v404
    %v450 = vadd.f32 %v136, %v409
    %v451 = vadd.f32 %v137, %v412
    %v452 = vadd.f32 %v138, %v417
    %v453 = vadd.f32 %v139, %v420
    %v454 = vadd.f32 %v140, %v425
    %v455 = vadd.f32 %v141, %v428
    %v456 = vadd.f32 %v142, %v433
    %v457 = vadd.f32 %v143, %v436
    %v458 = vadd.f32 %v144, %v441
    %v459 = vpack.c.bf16 %v447, %v446
    %v460 = vpack.c.bf16 %v449, %v448
    %v461 = vpack.c.bf16 %v451, %v450
    %v462 = vpack.c.bf16 %v453, %v452
    %v463 = vpack.c.bf16 %v455, %v454
    %v464 = vpack.c.bf16 %v457, %v456
    %v465 = vpack.c.bf16 %v458, %v458
    %v466 = vld [vmem:[%s4] sm:$0x1]
    %v467 = vlaneseq
    %v468 = vshrl.u32 %v467, 7
    %v469 = vsub.s32 0, %v468
    %v470 = vrot.slane %v466, %v469
    %vm471 = vcmp.eq.s32.totalorder %v146, %v470
    %vm472 = vcmp.eq.s32.totalorder %v147, %v470
    %vm473 = vcmp.eq.s32.totalorder %v148, %v470
    %vm474 = vcmp.eq.s32.totalorder %v149, %v470
    %vm475 = vcmp.eq.s32.totalorder %v150, %v470
    %v476 = vsel %vm471, 1, 0
    %v477 = vsel %vm472, 1, 0
    %v478 = vsel %vm473, 1, 0
    %v479 = vsel %vm474, 1, 0
    %v480 = vsel %vm475, 1, 0
    %v481 = vcvt.s32.f32 %v476
    %v482 = vcvt.s32.f32 %v477
    %v483 = vcvt.s32.f32 %v478
    %v484 = vcvt.s32.f32 %v479
    %v485 = vcvt.s32.f32 %v480
    %vm486 = vcmask 523264
    %v487 = vsel %vm486, %v481, 0.0
    %488 = vadd.xlane.f32.xlu0 %v487
    %v489 = vpop.xlane.xlu0 %488
    %v490 = vsel %vm486, %v482, 0.0
    %491 = vadd.xlane.f32.xlu0 %v490
    %v492 = vpop.xlane.xlu0 %491
    %v493 = vsel %vm486, %v483, 0.0
    %494 = vadd.xlane.f32.xlu0 %v493
    %v495 = vpop.xlane.xlu0 %494
    %v496 = vsel %vm486, %v484, 0.0
    %497 = vadd.xlane.f32.xlu0 %v496
    %v498 = vpop.xlane.xlu0 %497
    %v499 = vsel %vm486, %v485, 0.0
    %500 = vadd.xlane.f32.xlu0 %v499
    %v501 = vpop.xlane.xlu0 %500
    %v502 = vmax.f32 %v489, 1.0
    %v503 = vmax.f32 %v492, 1.0
    %v504 = vmax.f32 %v495, 1.0
    %v505 = vmax.f32 %v498, 1.0
    %v506 = vmax.f32 %v501, 1.0
    %v507 = vrcp.pop %v502
    %v508 = vmul.f32 1.0, %v507
    %v509 = vrcp.pop %v503
    %v510 = vmul.f32 1.0, %v509
    %v511 = vrcp.pop %v504
    %v512 = vmul.f32 1.0, %v511
    %v513 = vrcp.pop %v505
    %v514 = vmul.f32 1.0, %v513
    %v515 = vrcp.pop %v506
    %v516 = vmul.f32 1.0, %v515
    %v517 = vmul.f32 %v481, %v508
    %v518 = vmul.f32 %v482, %v510
    %v519 = vmul.f32 %v483, %v512
    %v520 = vmul.f32 %v484, %v514
    %v521 = vmul.f32 %v485, %v516
    %v522 = vpack.c.bf16 %v518, %v517
    %v523 = vpack.c.bf16 %v520, %v519
    %v524 = vpack.c.bf16 %v521, %v521
    %v525 = vld [vmem:[%s3] sm:$0xff]
    %v526 = vld [vmem:[%s3 + $0x8] sm:$0xff]
    %v527 = vld [vmem:[%s3 + $0x10] sm:$0xff]
    %v528 = vld [vmem:[%s3 + $0x18] sm:$0xff]
    %v529 = vld [vmem:[%s3 + $0x20] sm:$0xff]
    %v530 = vld [vmem:[%s3 + $0x28] sm:$0xff]
    %v531 = vld [vmem:[%s3 + $0x30] sm:$0xff]
    %v532 = vld [vmem:[%s3 + $0x38] sm:$0xff]
    %533 = vset.pattern.permute.xlu0 0
    %534 = vperm.xlu0 %533, %v525
    %v535 = vpop.permute.xlu0 %534
    %536 = vset.pattern.permute.xlu0 0
    %537 = vperm.xlu0 %536, %v526
    %v538 = vpop.permute.xlu0 %537
    %539 = vset.pattern.permute.xlu0 0
    %540 = vperm.xlu0 %539, %v527
    %v541 = vpop.permute.xlu0 %540
    %542 = vset.pattern.permute.xlu0 0
    %543 = vperm.xlu0 %542, %v528
    %v544 = vpop.permute.xlu0 %543
    %545 = vset.pattern.permute.xlu0 0
    %546 = vperm.xlu0 %545, %v529
    %v547 = vpop.permute.xlu0 %546
    %548 = vset.pattern.permute.xlu0 0
    %549 = vperm.xlu0 %548, %v530
    %v550 = vpop.permute.xlu0 %549
    %551 = vset.pattern.permute.xlu0 0
    %552 = vperm.xlu0 %551, %v531
    %v553 = vpop.permute.xlu0 %552
    %554 = vset.pattern.permute.xlu0 0
    %555 = vperm.xlu0 %554, %v532
    %v556 = vpop.permute.xlu0 %555
    %vm557 = vcmp.eq.s32.totalorder %v66, %v535
    %vm558 = vcmp.eq.s32.totalorder %v66, %v538
    %vm559 = vcmp.eq.s32.totalorder %v66, %v541
    %vm560 = vcmp.eq.s32.totalorder %v66, %v544
    %vm561 = vcmp.eq.s32.totalorder %v66, %v547
    %vm562 = vcmp.eq.s32.totalorder %v66, %v550
    %vm563 = vcmp.eq.s32.totalorder %v66, %v553
    %vm564 = vcmp.eq.s32.totalorder %v66, %v556
    %v565 = vsel %vm557, 1, 0
    %v566 = vsel %vm558, 1, 0
    %v567 = vsel %vm559, 1, 0
    %v568 = vsel %vm560, 1, 0
    %v569 = vsel %vm561, 1, 0
    %v570 = vsel %vm562, 1, 0
    %v571 = vsel %vm563, 1, 0
    %v572 = vsel %vm564, 1, 0
    %v573 = vcvt.s32.f32 %v565
    %v574 = vcvt.s32.f32 %v566
    %v575 = vcvt.s32.f32 %v567
    %v576 = vcvt.s32.f32 %v568
    %v577 = vcvt.s32.f32 %v569
    %v578 = vcvt.s32.f32 %v570
    %v579 = vcvt.s32.f32 %v571
    %v580 = vcvt.s32.f32 %v572
    %v581 = vpack.c.bf16 %v574, %v573
    %v582 = vpack.c.bf16 %v576, %v575
    %v583 = vpack.c.bf16 %v578, %v577
    %v584 = vpack.c.bf16 %v580, %v579
    %v585 = vpack.c.bf16 %v51, %v51
    %vm586 = vcmask 64512
    %v588 = vsel %vm586, %v581, 0
    %v591 = vsel %vm586, %v582, 0
    %v594 = vsel %vm586, %v583, 0
    %v597 = vsel %vm586, %v584, 0
    %vm599 = vcmask 1043456
    %v601 = vsel %vm599, %v585, 0
    %603 = vmatprep.subr.bf16.mxu0 0
    %604 = vmatpush1.bf16.msra.mxu0 0
    %605 = vmatprep.subr.bf16.mxu0 0
    %606 = vmatpush1.bf16.msra.mxu0 0
    %607 = vmatprep.subr.bf16.mxu0 0
    %608 = vmatpush1.bf16.msra.mxu0 0
    %609 = vmatprep.subr.bf16.mxu0 0
    %610 = vmatpush1.bf16.msra.mxu0 0
    %611 = vmatprep.subr.bf16.mxu0 0
    %612 = vmatpush1.bf16.msra.mxu0 0
    %613 = vmatprep.subr.bf16.mxu0 0
    %614 = vmatpush1.bf16.msra.mxu0 0
    %615 = vmatprep.subr.bf16.mxu0 0
    %616 = vmatpush1.bf16.msra.mxu0 0
    %617 = vmatprep.subr.bf16.mxu0 0
    %618 = vmatpush1.bf16.msra.mxu0 %v601
    %619 = vmatprep.subr.bf16.mxu0 0
    %620 = vmatpush2.bf16.msra.mxu0 0
    %621 = vmatprep.subr.bf16.mxu0 0
    %622 = vmatpush2.bf16.msra.mxu0 0
    %623 = vmatprep.subr.bf16.mxu0 0
    %624 = vmatpush2.bf16.msra.mxu0 0
    %625 = vmatprep.subr.bf16.mxu0 0
    %626 = vmatpush2.bf16.msra.mxu0 0
    %627 = vmatprep.subr.bf16.mxu0 0
    %628 = vmatpush2.bf16.msra.mxu0 0
    %629 = vmatprep.subr.bf16.mxu0 0
    %630 = vmatpush2.bf16.msra.mxu0 0
    %631 = vmatprep.subr.bf16.mxu0 0
    %632 = vmatpush2.bf16.msra.mxu0 0
    %633 = vmatprep.subr.bf16.mxu0 0
    %634 = vmatpush2.bf16.msra.mxu0 0
    %635 = vmatprep.mubr.bf16.mxu0 0
    %636 = vmatmul.mubr.bf16.gmra.mxu0 %v588
    %v637 = vpop.f32.mrf.mxu0
    %v638 = vadd.f32 0.0, %v637
    %v639 = vpop.f32.mrf.mxu0
    %v640 = vpop.f32.mrf.mxu0
    %v641 = vadd.f32 0.0, %v640
    %v642 = vpop.f32.mrf.mxu0
    %643 = vmatprep.mubr.bf16.mxu0 0
    %644 = vmatmul.mubr.bf16.gmra.mxu0 %v591
    %v645 = vpop.f32.mrf.mxu0
    %v646 = vadd.f32 0.0, %v645
    %v647 = vpop.f32.mrf.mxu0
    %v648 = vpop.f32.mrf.mxu0
    %v649 = vadd.f32 0.0, %v648
    %v650 = vpop.f32.mrf.mxu0
    %651 = vmatprep.mubr.bf16.mxu0 0
    %652 = vmatmul.mubr.bf16.gmra.mxu0 %v594
    %v653 = vpop.f32.mrf.mxu0
    %v654 = vadd.f32 0.0, %v653
    %v655 = vpop.f32.mrf.mxu0
    %v656 = vpop.f32.mrf.mxu0
    %v657 = vadd.f32 0.0, %v656
    %v658 = vpop.f32.mrf.mxu0
    %659 = vmatprep.mubr.bf16.mxu0 0
    %660 = vmatmul.mubr.bf16.gmra.mxu0 %v597
    %v661 = vpop.f32.mrf.mxu0
    %v662 = vadd.f32 0.0, %v661
    %v663 = vpop.f32.mrf.mxu0
    %v664 = vpop.f32.mrf.mxu0
    %v665 = vadd.f32 0.0, %v664
    %v666 = vpop.f32.mrf.mxu0
    %667 = vdwg.mxu0
    %v668 = vld [vmem:[%s6] sm:$0x1]
    %v669 = vadd.s32 %v668, 32
    %v670 = vlaneseq
    %v671 = vshrl.u32 %v670, 7
    %v672 = vsub.s32 0, %v671
    %v673 = vrot.slane %v669, %v672
    %vm674 = vcmp.eq.s32.totalorder %v146, %v673
    %vm675 = vcmp.eq.s32.totalorder %v147, %v673
    %vm676 = vcmp.eq.s32.totalorder %v148, %v673
    %vm677 = vcmp.eq.s32.totalorder %v149, %v673
    %vm678 = vcmp.eq.s32.totalorder %v150, %v673
    %v679 = vsel %vm674, 1, 0
    %v680 = vsel %vm675, 1, 0
    %v681 = vsel %vm676, 1, 0
    %v682 = vsel %vm677, 1, 0
    %v683 = vsel %vm678, 1, 0
    %v684 = vcvt.s32.f32 %v679
    %v685 = vcvt.s32.f32 %v680
    %v686 = vcvt.s32.f32 %v681
    %v687 = vcvt.s32.f32 %v682
    %v688 = vcvt.s32.f32 %v683
    %v689 = vpack.c.bf16 %v685, %v684
    %v690 = vpack.c.bf16 %v687, %v686
    %v691 = vpack.c.bf16 %v688, %v688
    %v692 = vld [vmem:[%s7] sm:$0xff]
    %v693 = vld [vmem:[%s7 + $0x8] sm:$0xff]
    %v694 = vld [vmem:[%s7 + $0x10] sm:$0xff]
    %v695 = vld [vmem:[%s7 + $0x18] sm:$0xff]
    %696 = vset.pattern.permute.xlu0 0
    %697 = vperm.xlu0 %696, %v692
    %v698 = vpop.permute.xlu0 %697
    %699 = vset.pattern.permute.xlu0 0
    %700 = vperm.xlu0 %699, %v693
    %v701 = vpop.permute.xlu0 %700
    %702 = vset.pattern.permute.xlu0 0
    %703 = vperm.xlu0 %702, %v694
    %v704 = vpop.permute.xlu0 %703
    %705 = vset.pattern.permute.xlu0 0
    %706 = vperm.xlu0 %705, %v695
    %v707 = vpop.permute.xlu0 %706
    %vm708 = vcmp.eq.s32.totalorder %v66, %v698
    %vm709 = vcmp.eq.s32.totalorder %v66, %v701
    %vm710 = vcmp.eq.s32.totalorder %v66, %v704
    %vm711 = vcmp.eq.s32.totalorder %v66, %v707
    %v712 = vsel %vm708, 1, 0
    %v713 = vsel %vm709, 1, 0
    %v714 = vsel %vm710, 1, 0
    %v715 = vsel %vm711, 1, 0
    %v716 = vcvt.s32.f32 %v712
    %v717 = vcvt.s32.f32 %v713
    %v718 = vcvt.s32.f32 %v714
    %v719 = vcvt.s32.f32 %v715
    %v720 = vpack.c.bf16 %v717, %v716
    %v721 = vpack.c.bf16 %v719, %v718
    %v723 = vsel %vm204, %v689, 0
    %v726 = vsel %vm204, %v690, 0
    %v729 = vsel %vm204, %v691, 0
    %731 = vmatprep.subr.bf16.mxu0 0
    %732 = vmatpush1.bf16.msra.mxu0 0
    %733 = vmatprep.subr.bf16.mxu0 0
    %734 = vmatpush1.bf16.msra.mxu0 0
    %735 = vmatprep.subr.bf16.mxu0 0
    %736 = vmatpush1.bf16.msra.mxu0 0
    %737 = vmatprep.subr.bf16.mxu0 0
    %738 = vmatpush1.bf16.msra.mxu0 0
    %739 = vmatprep.subr.bf16.mxu0 0
    %740 = vmatpush1.bf16.msra.mxu0 0
    %741 = vmatprep.subr.bf16.mxu0 0
    %742 = vmatpush1.bf16.msra.mxu0 0
    %743 = vmatprep.subr.bf16.mxu0 0
    %744 = vmatpush1.bf16.msra.mxu0 %v721
    %745 = vmatprep.subr.bf16.mxu0 0
    %746 = vmatpush1.bf16.msra.mxu0 %v720
    %747 = vmatprep.subr.bf16.mxu0 0
    %748 = vmatpush2.bf16.msra.mxu0 0
    %749 = vmatprep.subr.bf16.mxu0 0
    %750 = vmatpush2.bf16.msra.mxu0 0
    %751 = vmatprep.subr.bf16.mxu0 0
    %752 = vmatpush2.bf16.msra.mxu0 0
    %753 = vmatprep.subr.bf16.mxu0 0
    %754 = vmatpush2.bf16.msra.mxu0 0
    %755 = vmatprep.subr.bf16.mxu0 0
    %756 = vmatpush2.bf16.msra.mxu0 0
    %757 = vmatprep.subr.bf16.mxu0 0
    %758 = vmatpush2.bf16.msra.mxu0 0
    %759 = vmatprep.subr.bf16.mxu0 0
    %760 = vmatpush2.bf16.msra.mxu0 0
    %761 = vmatprep.subr.bf16.mxu0 0
    %762 = vmatpush2.bf16.msra.mxu0 0
    %763 = vmatprep.mubr.bf16.mxu0 0
    %764 = vmatmul.mubr.bf16.gmra.mxu0 %v723
    %v765 = vpop.f32.mrf.mxu0
    %v766 = vadd.f32 0.0, %v765
    %v767 = vpop.f32.mrf.mxu0
    %v768 = vpop.f32.mrf.mxu0
    %v769 = vadd.f32 0.0, %v768
    %v770 = vpop.f32.mrf.mxu0
    %771 = vmatprep.mubr.bf16.mxu0 0
    %772 = vmatmul.mubr.bf16.gmra.mxu0 %v726
    %v773 = vpop.f32.mrf.mxu0
    %v774 = vadd.f32 0.0, %v773
    %v775 = vpop.f32.mrf.mxu0
    %v776 = vpop.f32.mrf.mxu0
    %v777 = vadd.f32 0.0, %v776
    %v778 = vpop.f32.mrf.mxu0
    %779 = vmatprep.mubr.bf16.mxu0 0
    %780 = vmatmul.mubr.bf16.gmra.mxu0 %v729
    %v781 = vpop.f32.mrf.mxu0
    %v782 = vadd.f32 0.0, %v781
    %v783 = vpop.f32.mrf.mxu0
    %v784 = vpop.f32.mrf.mxu0
    %v785 = vpop.f32.mrf.mxu0
    %786 = vdwg.mxu0
    %v787 = vpack.c.bf16 %v769, %v766
    %v788 = vpack.c.bf16 %v777, %v774
    %v789 = vpack.c.bf16 %v782, %v782
    %v790 = vlaneseq
    %v791 = vshrl.u32 %v790, 7
    %v792 = vsub.s32 0, %v791
    %v793 = vrot.slane %v51, %v792
    %vm794 = vcmp.lt.s32.totalorder %v146, 16
    %vm795 = vcmp.lt.s32.totalorder %v147, 16
    %vm796 = vcmp.lt.s32.totalorder %v148, 16
    %vm797 = vcmp.lt.s32.totalorder %v149, 16
    %vm798 = vcmp.lt.s32.totalorder %v150, 16
    %v799 = vpack.c.bf16 %v47, %v46
    %v800 = vpack.c.bf16 %v49, %v48
    %v801 = vpack.c.bf16 %v50, %v50
    %vm802 = vcmask 326656
    %v804 = vsel %vm802, %v459, 0
    %v807 = vsel %vm802, %v460, 0
    %v810 = vsel %vm802, %v461, 0
    %v813 = vsel %vm802, %v462, 0
    %v816 = vsel %vm802, %v463, 0
    %v819 = vsel %vm802, %v464, 0
    %v822 = vsel %vm802, %v465, 0
    %v825 = vsel %vm599, %v801, 0
    %827 = vmatprep.subr.bf16.mxu0 0
    %828 = vmatpush1.bf16.msra.mxu0 0
    %829 = vmatprep.subr.bf16.mxu0 0
    %830 = vmatpush1.bf16.msra.mxu0 0
    %831 = vmatprep.subr.bf16.mxu0 0
    %832 = vmatpush1.bf16.msra.mxu0 0
    %833 = vmatprep.subr.bf16.mxu0 0
    %834 = vmatpush1.bf16.msra.mxu0 0
    %835 = vmatprep.subr.bf16.mxu0 0
    %836 = vmatpush1.bf16.msra.mxu0 0
    %837 = vmatprep.subr.bf16.mxu0 0
    %838 = vmatpush1.bf16.msra.mxu0 %v825
    %839 = vmatprep.subr.bf16.mxu0 0
    %840 = vmatpush1.bf16.msra.mxu0 %v800
    %841 = vmatprep.subr.bf16.mxu0 0
    %842 = vmatpush1.bf16.msra.mxu0 %v799
    %843 = vmatprep.subr.bf16.mxu0 0
    %844 = vmatpush2.bf16.msra.mxu0 0
    %845 = vmatprep.subr.bf16.mxu0 0
    %846 = vmatpush2.bf16.msra.mxu0 0
    %847 = vmatprep.subr.bf16.mxu0 0
    %848 = vmatpush2.bf16.msra.mxu0 0
    %849 = vmatprep.subr.bf16.mxu0 0
    %850 = vmatpush2.bf16.msra.mxu0 0
    %851 = vmatprep.subr.bf16.mxu0 0
    %852 = vmatpush2.bf16.msra.mxu0 0
    %853 = vmatprep.subr.bf16.mxu0 0
    %854 = vmatpush2.bf16.msra.mxu0 0
    %855 = vmatprep.subr.bf16.mxu0 0
    %856 = vmatpush2.bf16.msra.mxu0 0
    %857 = vmatprep.subr.bf16.mxu0 0
    %858 = vmatpush2.bf16.msra.mxu0 0
    %859 = vmatprep.mubr.bf16.mxu0 0
    %860 = vmatmul.mubr.bf16.gmra.mxu0 %v804
    %v861 = vpop.f32.mrf.mxu0
    %v862 = vadd.f32 0.0, %v861
    %v863 = vpop.f32.mrf.mxu0
    %v864 = vpop.f32.mrf.mxu0
    %v865 = vadd.f32 0.0, %v864
    %v866 = vpop.f32.mrf.mxu0
    %867 = vmatprep.mubr.bf16.mxu0 0
    %868 = vmatmul.mubr.bf16.gmra.mxu0 %v807
    %v869 = vpop.f32.mrf.mxu0
    %v870 = vadd.f32 0.0, %v869
    %v871 = vpop.f32.mrf.mxu0
    %v872 = vpop.f32.mrf.mxu0
    %v873 = vadd.f32 0.0, %v872
    %v874 = vpop.f32.mrf.mxu0
    %875 = vmatprep.mubr.bf16.mxu0 0
    %876 = vmatmul.mubr.bf16.gmra.mxu0 %v810
    %v877 = vpop.f32.mrf.mxu0
    %v878 = vadd.f32 0.0, %v877
    %v879 = vpop.f32.mrf.mxu0
    %v880 = vpop.f32.mrf.mxu0
    %v881 = vadd.f32 0.0, %v880
    %v882 = vpop.f32.mrf.mxu0
    %883 = vmatprep.mubr.bf16.mxu0 0
    %884 = vmatmul.mubr.bf16.gmra.mxu0 %v813
    %v885 = vpop.f32.mrf.mxu0
    %v886 = vadd.f32 0.0, %v885
    %v887 = vpop.f32.mrf.mxu0
    %v888 = vpop.f32.mrf.mxu0
    %v889 = vadd.f32 0.0, %v888
    %v890 = vpop.f32.mrf.mxu0
    %891 = vmatprep.mubr.bf16.mxu0 0
    %892 = vmatmul.mubr.bf16.gmra.mxu0 %v816
    %v893 = vpop.f32.mrf.mxu0
    %v894 = vadd.f32 0.0, %v893
    %v895 = vpop.f32.mrf.mxu0
    %v896 = vpop.f32.mrf.mxu0
    %v897 = vadd.f32 0.0, %v896
    %v898 = vpop.f32.mrf.mxu0
    %899 = vmatprep.mubr.bf16.mxu0 0
    %900 = vmatmul.mubr.bf16.gmra.mxu0 %v819
    %v901 = vpop.f32.mrf.mxu0
    %v902 = vadd.f32 0.0, %v901
    %v903 = vpop.f32.mrf.mxu0
    %v904 = vpop.f32.mrf.mxu0
    %v905 = vadd.f32 0.0, %v904
    %v906 = vpop.f32.mrf.mxu0
    %907 = vmatprep.mubr.bf16.mxu0 0
    %908 = vmatmul.mubr.bf16.gmra.mxu0 %v822
    %v909 = vpop.f32.mrf.mxu0
    %v910 = vadd.f32 0.0, %v909
    %v911 = vpop.f32.mrf.mxu0
    %v912 = vpop.f32.mrf.mxu0
    %v913 = vpop.f32.mrf.mxu0
    %914 = vdwg.mxu0
    %v915 = vmul.f32 %v894, %v793
    %v916 = vmul.f32 %v897, %v793
    %v917 = vmul.f32 %v902, %v793
    %v918 = vmul.f32 %v905, %v793
    %v919 = vmul.f32 %v910, %v793
    %v920 = vmul.f32 %v862, %v638
    %v921 = vmul.f32 %v865, %v641
    %v922 = vmul.f32 %v870, %v646
    %v923 = vmul.f32 %v873, %v649
    %v924 = vmul.f32 %v878, %v654
    %v925 = vmul.f32 %v881, %v657
    %v926 = vmul.f32 %v886, %v662
    %v927 = vmul.f32 %v889, %v665
    %v928 = vpack.c.bf16 %v921, %v920
    %v929 = vpack.c.bf16 %v923, %v922
    %v930 = vpack.c.bf16 %v925, %v924
    %v931 = vpack.c.bf16 %v927, %v926
    %v933 = vsel %vm486, %v522, 0
    %v936 = vsel %vm486, %v523, 0
    %v939 = vsel %vm486, %v524, 0
    %941 = vmatprep.subr.bf16.mxu0 0
    %942 = vmatpush1.bf16.msra.mxu0 0
    %943 = vmatprep.subr.bf16.mxu0 0
    %944 = vmatpush1.bf16.msra.mxu0 0
    %945 = vmatprep.subr.bf16.mxu0 0
    %946 = vmatpush1.bf16.msra.mxu0 0
    %947 = vmatprep.subr.bf16.mxu0 0
    %948 = vmatpush1.bf16.msra.mxu0 0
    %949 = vmatprep.subr.bf16.mxu0 0
    %950 = vmatpush1.bf16.msra.mxu0 %v931
    %951 = vmatprep.subr.bf16.mxu0 0
    %952 = vmatpush1.bf16.msra.mxu0 %v930
    %953 = vmatprep.subr.bf16.mxu0 0
    %954 = vmatpush1.bf16.msra.mxu0 %v929
    %955 = vmatprep.subr.bf16.mxu0 0
    %956 = vmatpush1.bf16.msra.mxu0 %v928
    %957 = vmatprep.subr.bf16.mxu0 0
    %958 = vmatpush2.bf16.msra.mxu0 0
    %959 = vmatprep.subr.bf16.mxu0 0
    %960 = vmatpush2.bf16.msra.mxu0 0
    %961 = vmatprep.subr.bf16.mxu0 0
    %962 = vmatpush2.bf16.msra.mxu0 0
    %963 = vmatprep.subr.bf16.mxu0 0
    %964 = vmatpush2.bf16.msra.mxu0 0
    %965 = vmatprep.subr.bf16.mxu0 0
    %966 = vmatpush2.bf16.msra.mxu0 0
    %967 = vmatprep.subr.bf16.mxu0 0
    %968 = vmatpush2.bf16.msra.mxu0 0
    %969 = vmatprep.subr.bf16.mxu0 0
    %970 = vmatpush2.bf16.msra.mxu0 0
    %971 = vmatprep.subr.bf16.mxu0 0
    %972 = vmatpush2.bf16.msra.mxu0 0
    %973 = vmatprep.mubr.bf16.mxu0 0
    %974 = vmatmul.mubr.bf16.gmra.mxu0 %v933
    %v975 = vpop.f32.mrf.mxu0
    %v976 = vadd.f32 0.0, %v975
    %v977 = vpop.f32.mrf.mxu0
    %v978 = vpop.f32.mrf.mxu0
    %v979 = vadd.f32 0.0, %v978
    %v980 = vpop.f32.mrf.mxu0
    %981 = vmatprep.mubr.bf16.mxu0 0
    %982 = vmatmul.mubr.bf16.gmra.mxu0 %v936
    %v983 = vpop.f32.mrf.mxu0
    %v984 = vadd.f32 0.0, %v983
    %v985 = vpop.f32.mrf.mxu0
    %v986 = vpop.f32.mrf.mxu0
    %v987 = vadd.f32 0.0, %v986
    %v988 = vpop.f32.mrf.mxu0
    %989 = vmatprep.mubr.bf16.mxu0 0
    %990 = vmatmul.mubr.bf16.gmra.mxu0 %v939
    %v991 = vpop.f32.mrf.mxu0
    %v992 = vadd.f32 0.0, %v991
    %v993 = vpop.f32.mrf.mxu0
    %v994 = vpop.f32.mrf.mxu0
    %v995 = vpop.f32.mrf.mxu0
    %996 = vdwg.mxu0
    %v997 = vpack.c.bf16 %v979, %v976
    %v998 = vpack.c.bf16 %v987, %v984
    %v999 = vpack.c.bf16 %v992, %v992
    %v1000 = vld [vmem:[%s9] sm:$0xf]
    %v1001 = vld [vmem:[%s9 + $0x4] sm:$0xf]
    %v1002 = vld [vmem:[%s9 + $0x8] sm:$0xf]
    %v1003 = vld [vmem:[%s9 + $0xc] sm:$0xf]
    %v1004 = vld [vmem:[%s9 + $0x10] sm:$0xf]
    %v1005 = vld [vmem:[%s9 + $0x14] sm:$0xf]
    %v1006 = vld [vmem:[%s9 + $0x18] sm:$0xf]
    %v1007 = vld [vmem:[%s9 + $0x1c] sm:$0xf]
    %v1008 = vpack.c.bf16 %v916, %v915
    %v1009 = vpack.c.bf16 %v918, %v917
    %v1010 = vpack.c.bf16 %v919, %v919
    %v1011 = vld [vmem:[%s10] sm:$0xf]
    %v1012 = vld [vmem:[%s10 + $0x4] sm:$0xf]
    %v1013 = vld [vmem:[%s10 + $0x8] sm:$0xf]
    %v1014 = vld [vmem:[%s10 + $0xc] sm:$0xf]
    %v1015 = vld [vmem:[%s10 + $0x10] sm:$0xf]
    %v1016 = vld [vmem:[%s10 + $0x14] sm:$0xf]
    %v1017 = vld [vmem:[%s10 + $0x18] sm:$0xf]
    %v1018 = vld [vmem:[%s10 + $0x1c] sm:$0xf]
    %v1027 = vunpack.c.l.b16 %v1011
    %v1028 = vunpack.c.l.b16 %v1012
    %v1029 = vunpack.c.l.b16 %v1013
    %v1030 = vunpack.c.l.b16 %v1014
    %v1031 = vunpack.c.l.b16 %v1015
    %v1032 = vunpack.c.l.b16 %v1016
    %v1033 = vunpack.c.l.b16 %v1017
    %v1034 = vunpack.c.l.b16 %v1018
    %v1035 = vpack.c.b16 %v1028, %v1027
    %v1036 = vpack.c.b16 %v1030, %v1029
    %v1037 = vpack.c.b16 %v1032, %v1031
    %v1038 = vpack.c.b16 %v1034, %v1033
    %v1044 = vsel %vm486, %v1008, 0
    %v1047 = vsel %vm486, %v1009, 0
    %v1050 = vsel %vm486, %v1010, 0
    %1052 = vmatprep.subr.bf16.mxu0 0
    %1053 = vmatpush1.bf16.msra.mxu0 0
    %1054 = vmatprep.subr.bf16.mxu0 0
    %1055 = vmatpush1.bf16.msra.mxu0 0
    %1056 = vmatprep.subr.bf16.mxu0 0
    %1057 = vmatpush1.bf16.msra.mxu0 0
    %1058 = vmatprep.subr.bf16.mxu0 0
    %1059 = vmatpush1.bf16.msra.mxu0 0
    %1060 = vmatprep.subr.bf16.mxu0 0
    %1061 = vmatpush1.bf16.msra.mxu0 %v1038
    %1062 = vmatprep.subr.bf16.mxu0 0
    %1063 = vmatpush1.bf16.msra.mxu0 %v1037
    %1064 = vmatprep.subr.bf16.mxu0 0
    %1065 = vmatpush1.bf16.msra.mxu0 %v1036
    %1066 = vmatprep.subr.bf16.mxu0 0
    %1067 = vmatpush1.bf16.msra.mxu0 %v1035
    %1068 = vmatprep.subr.bf16.mxu0 0
    %1069 = vmatpush2.bf16.msra.mxu0 0
    %1070 = vmatprep.subr.bf16.mxu0 0
    %1071 = vmatpush2.bf16.msra.mxu0 0
    %1072 = vmatprep.subr.bf16.mxu0 0
    %1073 = vmatpush2.bf16.msra.mxu0 0
    %1074 = vmatprep.subr.bf16.mxu0 0
    %1075 = vmatpush2.bf16.msra.mxu0 0
    %1076 = vmatprep.subr.bf16.mxu0 0
    %1077 = vmatpush2.bf16.msra.mxu0 0
    %1078 = vmatprep.subr.bf16.mxu0 0
    %1079 = vmatpush2.bf16.msra.mxu0 0
    %1080 = vmatprep.subr.bf16.mxu0 0
    %1081 = vmatpush2.bf16.msra.mxu0 0
    %1082 = vmatprep.subr.bf16.mxu0 0
    %1083 = vmatpush2.bf16.msra.mxu0 0
    %1084 = vmatprep.mubr.bf16.mxu0 0
    %1085 = vmatmul.mubr.bf16.gmra.mxu0 %v1044
    %v1086 = vpop.f32.mrf.mxu0
    %v1087 = vadd.f32 0.0, %v1086
    %v1088 = vpop.f32.mrf.mxu0
    %v1089 = vpop.f32.mrf.mxu0
    %v1090 = vadd.f32 0.0, %v1089
    %v1091 = vpop.f32.mrf.mxu0
    %1092 = vmatprep.mubr.bf16.mxu0 0
    %1093 = vmatmul.mubr.bf16.gmra.mxu0 %v1047
    %v1094 = vpop.f32.mrf.mxu0
    %v1095 = vadd.f32 0.0, %v1094
    %v1096 = vpop.f32.mrf.mxu0
    %v1097 = vpop.f32.mrf.mxu0
    %v1098 = vadd.f32 0.0, %v1097
    %v1099 = vpop.f32.mrf.mxu0
    %1100 = vmatprep.mubr.bf16.mxu0 0
    %1101 = vmatmul.mubr.bf16.gmra.mxu0 %v1050
    %v1102 = vpop.f32.mrf.mxu0
    %v1103 = vadd.f32 0.0, %v1102
    %v1104 = vpop.f32.mrf.mxu0
    %v1105 = vpop.f32.mrf.mxu0
    %v1106 = vpop.f32.mrf.mxu0
    %1107 = vdwg.mxu0
    %v1116 = vunpack.c.l.b16 %v1000
    %v1117 = vunpack.c.l.b16 %v1001
    %v1118 = vunpack.c.l.b16 %v1002
    %v1119 = vunpack.c.l.b16 %v1003
    %v1120 = vunpack.c.l.b16 %v1004
    %v1121 = vunpack.c.l.b16 %v1005
    %v1122 = vunpack.c.l.b16 %v1006
    %v1123 = vunpack.c.l.b16 %v1007
    %v1124 = vpack.c.b16 %v1117, %v1116
    %v1125 = vpack.c.b16 %v1119, %v1118
    %v1126 = vpack.c.b16 %v1121, %v1120
    %v1127 = vpack.c.b16 %v1123, %v1122
    %v1133 = vsel %vm486, %v997, 0
    %v1136 = vsel %vm486, %v998, 0
    %v1139 = vsel %vm486, %v999, 0
    %1141 = vmatprep.subr.bf16.mxu0 0
    %1142 = vmatpush1.bf16.msra.mxu0 0
    %1143 = vmatprep.subr.bf16.mxu0 0
    %1144 = vmatpush1.bf16.msra.mxu0 0
    %1145 = vmatprep.subr.bf16.mxu0 0
    %1146 = vmatpush1.bf16.msra.mxu0 0
    %1147 = vmatprep.subr.bf16.mxu0 0
    %1148 = vmatpush1.bf16.msra.mxu0 0
    %1149 = vmatprep.subr.bf16.mxu0 0
    %1150 = vmatpush1.bf16.msra.mxu0 %v1127
    %1151 = vmatprep.subr.bf16.mxu0 0
    %1152 = vmatpush1.bf16.msra.mxu0 %v1126
    %1153 = vmatprep.subr.bf16.mxu0 0
    %1154 = vmatpush1.bf16.msra.mxu0 %v1125
    %1155 = vmatprep.subr.bf16.mxu0 0
    %1156 = vmatpush1.bf16.msra.mxu0 %v1124
    %1157 = vmatprep.subr.bf16.mxu0 0
    %1158 = vmatpush2.bf16.msra.mxu0 0
    %1159 = vmatprep.subr.bf16.mxu0 0
    %1160 = vmatpush2.bf16.msra.mxu0 0
    %1161 = vmatprep.subr.bf16.mxu0 0
    %1162 = vmatpush2.bf16.msra.mxu0 0
    %1163 = vmatprep.subr.bf16.mxu0 0
    %1164 = vmatpush2.bf16.msra.mxu0 0
    %1165 = vmatprep.subr.bf16.mxu0 0
    %1166 = vmatpush2.bf16.msra.mxu0 0
    %1167 = vmatprep.subr.bf16.mxu0 0
    %1168 = vmatpush2.bf16.msra.mxu0 0
    %1169 = vmatprep.subr.bf16.mxu0 0
    %1170 = vmatpush2.bf16.msra.mxu0 0
    %1171 = vmatprep.subr.bf16.mxu0 0
    %1172 = vmatpush2.bf16.msra.mxu0 0
    %1173 = vmatprep.mubr.bf16.mxu0 0
    %1174 = vmatmul.mubr.bf16.gmra.mxu0 %v1133
    %v1175 = vpop.f32.mrf.mxu0
    %v1176 = vadd.f32 %v1087, %v1175
    %v1177 = vpop.f32.mrf.mxu0
    %v1178 = vpop.f32.mrf.mxu0
    %v1179 = vadd.f32 %v1090, %v1178
    %v1180 = vpop.f32.mrf.mxu0
    %1181 = vmatprep.mubr.bf16.mxu0 0
    %1182 = vmatmul.mubr.bf16.gmra.mxu0 %v1136
    %v1183 = vpop.f32.mrf.mxu0
    %v1184 = vadd.f32 %v1095, %v1183
    %v1185 = vpop.f32.mrf.mxu0
    %v1186 = vpop.f32.mrf.mxu0
    %v1187 = vadd.f32 %v1098, %v1186
    %v1188 = vpop.f32.mrf.mxu0
    %1189 = vmatprep.mubr.bf16.mxu0 0
    %1190 = vmatmul.mubr.bf16.gmra.mxu0 %v1139
    %v1191 = vpop.f32.mrf.mxu0
    %v1192 = vadd.f32 %v1103, %v1191
    %v1193 = vpop.f32.mrf.mxu0
    %v1194 = vpop.f32.mrf.mxu0
    %v1195 = vpop.f32.mrf.mxu0
    %1196 = vdwg.mxu0
    %v1197 = vxor.u32 %v1176, 2147483648
    %v1198 = vxor.u32 %v1179, 2147483648
    %v1199 = vxor.u32 %v1184, 2147483648
    %v1200 = vxor.u32 %v1187, 2147483648
    %v1201 = vxor.u32 %v1192, 2147483648
    %v1202 = vmul.f32 %v1197, 1.442695
    %v1203 = vpow.pop %v1202
    %v1204 = vmul.f32 %v1198, 1.442695
    %v1205 = vpow.pop %v1204
    %v1206 = vmul.f32 %v1199, 1.442695
    %v1207 = vpow.pop %v1206
    %v1208 = vmul.f32 %v1200, 1.442695
    %v1209 = vpow.pop %v1208
    %v1210 = vmul.f32 %v1201, 1.442695
    %v1211 = vpow.pop %v1210
    %v1212 = vadd.f32 %v1203, 1.0
    %v1213 = vadd.f32 %v1205, 1.0
    %v1214 = vadd.f32 %v1207, 1.0
    %v1215 = vadd.f32 %v1209, 1.0
    %v1216 = vadd.f32 %v1211, 1.0
    %v1217 = vrcp.pop %v1212
    %v1218 = vmul.f32 1.0, %v1217
    %v1219 = vrcp.pop %v1213
    %v1220 = vmul.f32 1.0, %v1219
    %v1221 = vrcp.pop %v1214
    %v1222 = vmul.f32 1.0, %v1221
    %v1223 = vrcp.pop %v1215
    %v1224 = vmul.f32 1.0, %v1223
    %v1225 = vrcp.pop %v1216
    %v1226 = vmul.f32 1.0, %v1225
    %v1227 = vmul.f32 %v1218, %v976
    %v1228 = vmul.f32 %v1220, %v979
    %v1229 = vmul.f32 %v1222, %v984
    %v1230 = vmul.f32 %v1224, %v987
    %v1231 = vmul.f32 %v1226, %v992
    %v1232 = vsub.f32 1.0, %v1218
    %v1233 = vsub.f32 1.0, %v1220
    %v1234 = vsub.f32 1.0, %v1222
    %v1235 = vsub.f32 1.0, %v1224
    %v1236 = vsub.f32 1.0, %v1226
    %v1237 = vmul.f32 %v1232, %v915
    %v1238 = vmul.f32 %v1233, %v916
    %v1239 = vmul.f32 %v1234, %v917
    %v1240 = vmul.f32 %v1235, %v918
    %v1241 = vmul.f32 %v1236, %v919
    %v1242 = vadd.f32 %v1227, %v1237
    %v1243 = vadd.f32 %v1228, %v1238
    %v1244 = vadd.f32 %v1229, %v1239
    %v1245 = vadd.f32 %v1230, %v1240
    %v1246 = vadd.f32 %v1231, %v1241
    %v1247 = vpack.c.bf16 %v1243, %v1242
    %v1248 = vpack.c.bf16 %v1245, %v1244
    %v1249 = vpack.c.bf16 %v1246, %v1246
    %v1251 = vsel %vm802, %v787, 0
    %v1254 = vsel %vm802, %v788, 0
    %v1257 = vsel %vm802, %v789, 0
    %v1260 = vsel %vm599, %v1249, 0
    %1262 = vmatprep.subr.bf16.mxu0 0
    %1263 = vmatpush1.bf16.msra.mxu0 0
    %1264 = vmatprep.subr.bf16.mxu0 0
    %1265 = vmatpush1.bf16.msra.mxu0 0
    %1266 = vmatprep.subr.bf16.mxu0 0
    %1267 = vmatpush1.bf16.msra.mxu0 0
    %1268 = vmatprep.subr.bf16.mxu0 0
    %1269 = vmatpush1.bf16.msra.mxu0 0
    %1270 = vmatprep.subr.bf16.mxu0 0
    %1271 = vmatpush1.bf16.msra.mxu0 0
    %1272 = vmatprep.subr.bf16.mxu0 0
    %1273 = vmatpush1.bf16.msra.mxu0 %v1260
    %1274 = vmatprep.subr.bf16.mxu0 0
    %1275 = vmatpush1.bf16.msra.mxu0 %v1248
    %1276 = vmatprep.subr.bf16.mxu0 0
    %1277 = vmatpush1.bf16.msra.mxu0 %v1247
    %1278 = vmatprep.subr.bf16.mxu0 0
    %1279 = vmatpush2.bf16.msra.mxu0 0
    %1280 = vmatprep.subr.bf16.mxu0 0
    %1281 = vmatpush2.bf16.msra.mxu0 0
    %1282 = vmatprep.subr.bf16.mxu0 0
    %1283 = vmatpush2.bf16.msra.mxu0 0
    %1284 = vmatprep.subr.bf16.mxu0 0
    %1285 = vmatpush2.bf16.msra.mxu0 0
    %1286 = vmatprep.subr.bf16.mxu0 0
    %1287 = vmatpush2.bf16.msra.mxu0 0
    %1288 = vmatprep.subr.bf16.mxu0 0
    %1289 = vmatpush2.bf16.msra.mxu0 0
    %1290 = vmatprep.subr.bf16.mxu0 0
    %1291 = vmatpush2.bf16.msra.mxu0 0
    %1292 = vmatprep.subr.bf16.mxu0 0
    %1293 = vmatpush2.bf16.msra.mxu0 0
    %1294 = vmatprep.mubr.bf16.mxu0 0
    %1295 = vmatmul.mubr.bf16.gmra.mxu0 %v1251
    %v1296 = vpop.f32.mrf.mxu0
    %v1297 = vadd.f32 0.0, %v1296
    %v1298 = vpop.f32.mrf.mxu0
    %v1299 = vpop.f32.mrf.mxu0
    %v1300 = vadd.f32 0.0, %v1299
    %v1301 = vpop.f32.mrf.mxu0
    %1302 = vmatprep.mubr.bf16.mxu0 0
    %1303 = vmatmul.mubr.bf16.gmra.mxu0 %v1254
    %v1304 = vpop.f32.mrf.mxu0
    %v1305 = vadd.f32 0.0, %v1304
    %v1306 = vpop.f32.mrf.mxu0
    %v1307 = vpop.f32.mrf.mxu0
    %v1308 = vadd.f32 0.0, %v1307
    %v1309 = vpop.f32.mrf.mxu0
    %1310 = vmatprep.mubr.bf16.mxu0 0
    %1311 = vmatmul.mubr.bf16.gmra.mxu0 %v1257
    %v1312 = vpop.f32.mrf.mxu0
    %v1313 = vadd.f32 0.0, %v1312
    %v1314 = vpop.f32.mrf.mxu0
    %v1315 = vpop.f32.mrf.mxu0
    %v1316 = vpop.f32.mrf.mxu0
    %1317 = vdwg.mxu0
    %v1318 = vsel %vm794, 1, 0
    %v1319 = vsel %vm795, 1, 0
    %v1320 = vsel %vm796, 1, 0
    %v1321 = vsel %vm797, 1, 0
    %v1322 = vsel %vm798, 1, 0
    %vm1323 = vcmp.eq.s32.totalorder %v1318, 1
    %vm1324 = vcmp.eq.s32.totalorder %v1319, 1
    %vm1325 = vcmp.eq.s32.totalorder %v1320, 1
    %vm1326 = vcmp.eq.s32.totalorder %v1321, 1
    %vm1327 = vcmp.eq.s32.totalorder %v1322, 1
    %v1328 = vsel %vm1323, %v1242, %v976
    %v1329 = vsel %vm1324, %v1243, %v979
    %v1330 = vsel %vm1325, %v1244, %v984
    %v1331 = vsel %vm1326, %v1245, %v987
    %v1332 = vsel %vm1327, %v1246, %v992
    %v1333 = vadd.f32 %v1328, %v1297
    %v1334 = vadd.f32 %v1329, %v1300
    %v1335 = vadd.f32 %v1330, %v1305
    %v1336 = vadd.f32 %v1331, %v1308
    %v1337 = vadd.f32 %v1332, %v1313
    %v1338 = vmul.f32 %v1333, %v1333
    %v1339 = vmul.f32 %v1334, %v1334
    %v1340 = vmul.f32 %v1335, %v1335
    %v1341 = vmul.f32 %v1336, %v1336
    %v1342 = vmul.f32 %v1337, %v1337
    %v1343 = vsel %vm486, %v1338, 0.0
    %1344 = vadd.xlane.f32.xlu0 %v1343
    %v1345 = vpop.xlane.xlu0 %1344
    %v1346 = vsel %vm486, %v1339, 0.0
    %1347 = vadd.xlane.f32.xlu0 %v1346
    %v1348 = vpop.xlane.xlu0 %1347
    %v1349 = vsel %vm486, %v1340, 0.0
    %1350 = vadd.xlane.f32.xlu0 %v1349
    %v1351 = vpop.xlane.xlu0 %1350
    %v1352 = vsel %vm486, %v1341, 0.0
    %1353 = vadd.xlane.f32.xlu0 %v1352
    %v1354 = vpop.xlane.xlu0 %1353
    %v1355 = vsel %vm486, %v1342, 0.0
    %1356 = vadd.xlane.f32.xlu0 %v1355
    %v1357 = vpop.xlane.xlu0 %1356
    %v1358 = vadd.f32 %v1345, 1e-24
    %v1359 = vadd.f32 %v1348, 1e-24
    %v1360 = vadd.f32 %v1351, 1e-24
    %v1361 = vadd.f32 %v1354, 1e-24
    %v1362 = vadd.f32 %v1357, 1e-24
    %v1363 = vrsqrt.pop %v1358
    %v1364 = vrsqrt.pop %v1359
    %v1365 = vrsqrt.pop %v1360
    %v1366 = vrsqrt.pop %v1361
    %v1367 = vrsqrt.pop %v1362
    %v1368 = vmul.f32 %v1333, %v1363
    %v1369 = vmul.f32 %v1334, %v1364
    %v1370 = vmul.f32 %v1335, %v1365
    %v1371 = vmul.f32 %v1336, %v1366
    %v1372 = vmul.f32 %v1337, %v1367
    %v1373 = vadd.f32 %v46, %v1368
    %v1374 = vadd.f32 %v47, %v1369
    %v1375 = vadd.f32 %v48, %v1370
    %v1376 = vadd.f32 %v49, %v1371
    %v1377 = vadd.f32 %v50, %v1372
    %v1378 = vpack.c.bf16 %v1369, %v1368
    %v1379 = vpack.c.bf16 %v1371, %v1370
    %v1380 = vpack.c.bf16 %v1372, %v1372
    %v1382 = vsel %vm599, %v1380, 0
    %1384 = vmatprep.subr.bf16.mxu0 0
    %1385 = vmatpush1.bf16.msra.mxu0 0
    %1386 = vmatprep.subr.bf16.mxu0 0
    %1387 = vmatpush1.bf16.msra.mxu0 0
    %1388 = vmatprep.subr.bf16.mxu0 0
    %1389 = vmatpush1.bf16.msra.mxu0 0
    %1390 = vmatprep.subr.bf16.mxu0 0
    %1391 = vmatpush1.bf16.msra.mxu0 0
    %1392 = vmatprep.subr.bf16.mxu0 0
    %1393 = vmatpush1.bf16.msra.mxu0 0
    %1394 = vmatprep.subr.bf16.mxu0 0
    %1395 = vmatpush1.bf16.msra.mxu0 %v1382
    %1396 = vmatprep.subr.bf16.mxu0 0
    %1397 = vmatpush1.bf16.msra.mxu0 %v1379
    %1398 = vmatprep.subr.bf16.mxu0 0
    %1399 = vmatpush1.bf16.msra.mxu0 %v1378
    %1400 = vmatprep.subr.bf16.mxu0 0
    %1401 = vmatpush2.bf16.msra.mxu0 0
    %1402 = vmatprep.subr.bf16.mxu0 0
    %1403 = vmatpush2.bf16.msra.mxu0 0
    %1404 = vmatprep.subr.bf16.mxu0 0
    %1405 = vmatpush2.bf16.msra.mxu0 0
    %1406 = vmatprep.subr.bf16.mxu0 0
    %1407 = vmatpush2.bf16.msra.mxu0 0
    %1408 = vmatprep.subr.bf16.mxu0 0
    %1409 = vmatpush2.bf16.msra.mxu0 0
    %1410 = vmatprep.subr.bf16.mxu0 0
    %1411 = vmatpush2.bf16.msra.mxu0 0
    %1412 = vmatprep.subr.bf16.mxu0 0
    %1413 = vmatpush2.bf16.msra.mxu0 0
    %1414 = vmatprep.subr.bf16.mxu0 0
    %1415 = vmatpush2.bf16.msra.mxu0 0
    %1416 = vmatprep.mubr.bf16.mxu0 0
    %1417 = vmatmul.mubr.bf16.gmra.mxu0 %v804
    %v1418 = vpop.f32.mrf.mxu0
    %v1419 = vadd.f32 0.0, %v1418
    %v1420 = vpop.f32.mrf.mxu0
    %v1421 = vpop.f32.mrf.mxu0
    %v1422 = vadd.f32 0.0, %v1421
    %v1423 = vpop.f32.mrf.mxu0
    %1424 = vmatprep.mubr.bf16.mxu0 0
    %1425 = vmatmul.mubr.bf16.gmra.mxu0 %v807
    %v1426 = vpop.f32.mrf.mxu0
    %v1427 = vadd.f32 0.0, %v1426
    %v1428 = vpop.f32.mrf.mxu0
    %v1429 = vpop.f32.mrf.mxu0
    %v1430 = vadd.f32 0.0, %v1429
    %v1431 = vpop.f32.mrf.mxu0
    %1432 = vmatprep.mubr.bf16.mxu0 0
    %1433 = vmatmul.mubr.bf16.gmra.mxu0 %v810
    %v1434 = vpop.f32.mrf.mxu0
    %v1435 = vadd.f32 0.0, %v1434
    %v1436 = vpop.f32.mrf.mxu0
    %v1437 = vpop.f32.mrf.mxu0
    %v1438 = vadd.f32 0.0, %v1437
    %v1439 = vpop.f32.mrf.mxu0
    %1440 = vmatprep.mubr.bf16.mxu0 0
    %1441 = vmatmul.mubr.bf16.gmra.mxu0 %v813
    %v1442 = vpop.f32.mrf.mxu0
    %v1443 = vadd.f32 0.0, %v1442
    %v1444 = vpop.f32.mrf.mxu0
    %v1445 = vpop.f32.mrf.mxu0
    %v1446 = vadd.f32 0.0, %v1445
    %v1447 = vpop.f32.mrf.mxu0
    %1448 = vmatprep.mubr.bf16.mxu0 0
    %1449 = vmatmul.mubr.bf16.gmra.mxu0 %v816
    %v1450 = vpop.f32.mrf.mxu0
    %v1451 = vadd.f32 0.0, %v1450
    %v1452 = vpop.f32.mrf.mxu0
    %v1453 = vpop.f32.mrf.mxu0
    %v1454 = vadd.f32 0.0, %v1453
    %v1455 = vpop.f32.mrf.mxu0
    %1456 = vmatprep.mubr.bf16.mxu0 0
    %1457 = vmatmul.mubr.bf16.gmra.mxu0 %v819
    %v1458 = vpop.f32.mrf.mxu0
    %v1459 = vadd.f32 0.0, %v1458
    %v1460 = vpop.f32.mrf.mxu0
    %v1461 = vpop.f32.mrf.mxu0
    %v1462 = vadd.f32 0.0, %v1461
    %v1463 = vpop.f32.mrf.mxu0
    %1464 = vmatprep.mubr.bf16.mxu0 0
    %1465 = vmatmul.mubr.bf16.gmra.mxu0 %v822
    %v1466 = vpop.f32.mrf.mxu0
    %v1467 = vadd.f32 0.0, %v1466
    %v1468 = vpop.f32.mrf.mxu0
    %v1469 = vpop.f32.mrf.mxu0
    %v1470 = vpop.f32.mrf.mxu0
    %1471 = vdwg.mxu0
    %v1472 = vmul.f32 %v1451, %v793
    %v1473 = vmul.f32 %v1454, %v793
    %v1474 = vmul.f32 %v1459, %v793
    %v1475 = vmul.f32 %v1462, %v793
    %v1476 = vmul.f32 %v1467, %v793
    %v1477 = vmul.f32 %v1419, %v638
    %v1478 = vmul.f32 %v1422, %v641
    %v1479 = vmul.f32 %v1427, %v646
    %v1480 = vmul.f32 %v1430, %v649
    %v1481 = vmul.f32 %v1435, %v654
    %v1482 = vmul.f32 %v1438, %v657
    %v1483 = vmul.f32 %v1443, %v662
    %v1484 = vmul.f32 %v1446, %v665
    %v1485 = vpack.c.bf16 %v1478, %v1477
    %v1486 = vpack.c.bf16 %v1480, %v1479
    %v1487 = vpack.c.bf16 %v1482, %v1481
    %v1488 = vpack.c.bf16 %v1484, %v1483
    %1489 = vmatprep.subr.bf16.mxu0 0
    %1490 = vmatpush1.bf16.msra.mxu0 0
    %1491 = vmatprep.subr.bf16.mxu0 0
    %1492 = vmatpush1.bf16.msra.mxu0 0
    %1493 = vmatprep.subr.bf16.mxu0 0
    %1494 = vmatpush1.bf16.msra.mxu0 0
    %1495 = vmatprep.subr.bf16.mxu0 0
    %1496 = vmatpush1.bf16.msra.mxu0 0
    %1497 = vmatprep.subr.bf16.mxu0 0
    %1498 = vmatpush1.bf16.msra.mxu0 %v1488
    %1499 = vmatprep.subr.bf16.mxu0 0
    %1500 = vmatpush1.bf16.msra.mxu0 %v1487
    %1501 = vmatprep.subr.bf16.mxu0 0
    %1502 = vmatpush1.bf16.msra.mxu0 %v1486
    %1503 = vmatprep.subr.bf16.mxu0 0
    %1504 = vmatpush1.bf16.msra.mxu0 %v1485
    %1505 = vmatprep.subr.bf16.mxu0 0
    %1506 = vmatpush2.bf16.msra.mxu0 0
    %1507 = vmatprep.subr.bf16.mxu0 0
    %1508 = vmatpush2.bf16.msra.mxu0 0
    %1509 = vmatprep.subr.bf16.mxu0 0
    %1510 = vmatpush2.bf16.msra.mxu0 0
    %1511 = vmatprep.subr.bf16.mxu0 0
    %1512 = vmatpush2.bf16.msra.mxu0 0
    %1513 = vmatprep.subr.bf16.mxu0 0
    %1514 = vmatpush2.bf16.msra.mxu0 0
    %1515 = vmatprep.subr.bf16.mxu0 0
    %1516 = vmatpush2.bf16.msra.mxu0 0
    %1517 = vmatprep.subr.bf16.mxu0 0
    %1518 = vmatpush2.bf16.msra.mxu0 0
    %1519 = vmatprep.subr.bf16.mxu0 0
    %1520 = vmatpush2.bf16.msra.mxu0 0
    %1521 = vmatprep.mubr.bf16.mxu0 0
    %1522 = vmatmul.mubr.bf16.gmra.mxu0 %v933
    %v1523 = vpop.f32.mrf.mxu0
    %v1524 = vadd.f32 0.0, %v1523
    %v1525 = vpop.f32.mrf.mxu0
    %v1526 = vpop.f32.mrf.mxu0
    %v1527 = vadd.f32 0.0, %v1526
    %v1528 = vpop.f32.mrf.mxu0
    %1529 = vmatprep.mubr.bf16.mxu0 0
    %1530 = vmatmul.mubr.bf16.gmra.mxu0 %v936
    %v1531 = vpop.f32.mrf.mxu0
    %v1532 = vadd.f32 0.0, %v1531
    %v1533 = vpop.f32.mrf.mxu0
    %v1534 = vpop.f32.mrf.mxu0
    %v1535 = vadd.f32 0.0, %v1534
    %v1536 = vpop.f32.mrf.mxu0
    %1537 = vmatprep.mubr.bf16.mxu0 0
    %1538 = vmatmul.mubr.bf16.gmra.mxu0 %v939
    %v1539 = vpop.f32.mrf.mxu0
    %v1540 = vadd.f32 0.0, %v1539
    %v1541 = vpop.f32.mrf.mxu0
    %v1542 = vpop.f32.mrf.mxu0
    %v1543 = vpop.f32.mrf.mxu0
    %1544 = vdwg.mxu0
    %v1545 = vpack.c.bf16 %v1527, %v1524
    %v1546 = vpack.c.bf16 %v1535, %v1532
    %v1547 = vpack.c.bf16 %v1540, %v1540
    %s1548 = scalar_lea.vmem %s9, 32
    %v1549 = vld [vmem:[%s1548] sm:$0xf]
    %v1550 = vld [vmem:[%s1548 + $0x4] sm:$0xf]
    %v1551 = vld [vmem:[%s1548 + $0x8] sm:$0xf]
    %v1552 = vld [vmem:[%s1548 + $0xc] sm:$0xf]
    %v1553 = vld [vmem:[%s1548 + $0x10] sm:$0xf]
    %v1554 = vld [vmem:[%s1548 + $0x14] sm:$0xf]
    %v1555 = vld [vmem:[%s1548 + $0x18] sm:$0xf]
    %v1556 = vld [vmem:[%s1548 + $0x1c] sm:$0xf]
    %v1557 = vpack.c.bf16 %v1473, %v1472
    %v1558 = vpack.c.bf16 %v1475, %v1474
    %v1559 = vpack.c.bf16 %v1476, %v1476
    %s1560 = scalar_lea.vmem %s10, 32
    %v1561 = vld [vmem:[%s1560] sm:$0xf]
    %v1562 = vld [vmem:[%s1560 + $0x4] sm:$0xf]
    %v1563 = vld [vmem:[%s1560 + $0x8] sm:$0xf]
    %v1564 = vld [vmem:[%s1560 + $0xc] sm:$0xf]
    %v1565 = vld [vmem:[%s1560 + $0x10] sm:$0xf]
    %v1566 = vld [vmem:[%s1560 + $0x14] sm:$0xf]
    %v1567 = vld [vmem:[%s1560 + $0x18] sm:$0xf]
    %v1568 = vld [vmem:[%s1560 + $0x1c] sm:$0xf]
    %v1577 = vunpack.c.l.b16 %v1561
    %v1578 = vunpack.c.l.b16 %v1562
    %v1579 = vunpack.c.l.b16 %v1563
    %v1580 = vunpack.c.l.b16 %v1564
    %v1581 = vunpack.c.l.b16 %v1565
    %v1582 = vunpack.c.l.b16 %v1566
    %v1583 = vunpack.c.l.b16 %v1567
    %v1584 = vunpack.c.l.b16 %v1568
    %v1585 = vpack.c.b16 %v1578, %v1577
    %v1586 = vpack.c.b16 %v1580, %v1579
    %v1587 = vpack.c.b16 %v1582, %v1581
    %v1588 = vpack.c.b16 %v1584, %v1583
    %v1594 = vsel %vm486, %v1557, 0
    %v1597 = vsel %vm486, %v1558, 0
    %v1600 = vsel %vm486, %v1559, 0
    %1602 = vmatprep.subr.bf16.mxu0 0
    %1603 = vmatpush1.bf16.msra.mxu0 0
    %1604 = vmatprep.subr.bf16.mxu0 0
    %1605 = vmatpush1.bf16.msra.mxu0 0
    %1606 = vmatprep.subr.bf16.mxu0 0
    %1607 = vmatpush1.bf16.msra.mxu0 0
    %1608 = vmatprep.subr.bf16.mxu0 0
    %1609 = vmatpush1.bf16.msra.mxu0 0
    %1610 = vmatprep.subr.bf16.mxu0 0
    %1611 = vmatpush1.bf16.msra.mxu0 %v1588
    %1612 = vmatprep.subr.bf16.mxu0 0
    %1613 = vmatpush1.bf16.msra.mxu0 %v1587
    %1614 = vmatprep.subr.bf16.mxu0 0
    %1615 = vmatpush1.bf16.msra.mxu0 %v1586
    %1616 = vmatprep.subr.bf16.mxu0 0
    %1617 = vmatpush1.bf16.msra.mxu0 %v1585
    %1618 = vmatprep.subr.bf16.mxu0 0
    %1619 = vmatpush2.bf16.msra.mxu0 0
    %1620 = vmatprep.subr.bf16.mxu0 0
    %1621 = vmatpush2.bf16.msra.mxu0 0
    %1622 = vmatprep.subr.bf16.mxu0 0
    %1623 = vmatpush2.bf16.msra.mxu0 0
    %1624 = vmatprep.subr.bf16.mxu0 0
    %1625 = vmatpush2.bf16.msra.mxu0 0
    %1626 = vmatprep.subr.bf16.mxu0 0
    %1627 = vmatpush2.bf16.msra.mxu0 0
    %1628 = vmatprep.subr.bf16.mxu0 0
    %1629 = vmatpush2.bf16.msra.mxu0 0
    %1630 = vmatprep.subr.bf16.mxu0 0
    %1631 = vmatpush2.bf16.msra.mxu0 0
    %1632 = vmatprep.subr.bf16.mxu0 0
    %1633 = vmatpush2.bf16.msra.mxu0 0
    %1634 = vmatprep.mubr.bf16.mxu0 0
    %1635 = vmatmul.mubr.bf16.gmra.mxu0 %v1594
    %v1636 = vpop.f32.mrf.mxu0
    %v1637 = vadd.f32 0.0, %v1636
    %v1638 = vpop.f32.mrf.mxu0
    %v1639 = vpop.f32.mrf.mxu0
    %v1640 = vadd.f32 0.0, %v1639
    %v1641 = vpop.f32.mrf.mxu0
    %1642 = vmatprep.mubr.bf16.mxu0 0
    %1643 = vmatmul.mubr.bf16.gmra.mxu0 %v1597
    %v1644 = vpop.f32.mrf.mxu0
    %v1645 = vadd.f32 0.0, %v1644
    %v1646 = vpop.f32.mrf.mxu0
    %v1647 = vpop.f32.mrf.mxu0
    %v1648 = vadd.f32 0.0, %v1647
    %v1649 = vpop.f32.mrf.mxu0
    %1650 = vmatprep.mubr.bf16.mxu0 0
    %1651 = vmatmul.mubr.bf16.gmra.mxu0 %v1600
    %v1652 = vpop.f32.mrf.mxu0
    %v1653 = vadd.f32 0.0, %v1652
    %v1654 = vpop.f32.mrf.mxu0
    %v1655 = vpop.f32.mrf.mxu0
    %v1656 = vpop.f32.mrf.mxu0
    %1657 = vdwg.mxu0
    %v1666 = vunpack.c.l.b16 %v1549
    %v1667 = vunpack.c.l.b16 %v1550
    %v1668 = vunpack.c.l.b16 %v1551
    %v1669 = vunpack.c.l.b16 %v1552
    %v1670 = vunpack.c.l.b16 %v1553
    %v1671 = vunpack.c.l.b16 %v1554
    %v1672 = vunpack.c.l.b16 %v1555
    %v1673 = vunpack.c.l.b16 %v1556
    %v1674 = vpack.c.b16 %v1667, %v1666
    %v1675 = vpack.c.b16 %v1669, %v1668
    %v1676 = vpack.c.b16 %v1671, %v1670
    %v1677 = vpack.c.b16 %v1673, %v1672
    %v1683 = vsel %vm486, %v1545, 0
    %v1686 = vsel %vm486, %v1546, 0
    %v1689 = vsel %vm486, %v1547, 0
    %1691 = vmatprep.subr.bf16.mxu0 0
    %1692 = vmatpush1.bf16.msra.mxu0 0
    %1693 = vmatprep.subr.bf16.mxu0 0
    %1694 = vmatpush1.bf16.msra.mxu0 0
    %1695 = vmatprep.subr.bf16.mxu0 0
    %1696 = vmatpush1.bf16.msra.mxu0 0
    %1697 = vmatprep.subr.bf16.mxu0 0
    %1698 = vmatpush1.bf16.msra.mxu0 0
    %1699 = vmatprep.subr.bf16.mxu0 0
    %1700 = vmatpush1.bf16.msra.mxu0 %v1677
    %1701 = vmatprep.subr.bf16.mxu0 0
    %1702 = vmatpush1.bf16.msra.mxu0 %v1676
    %1703 = vmatprep.subr.bf16.mxu0 0
    %1704 = vmatpush1.bf16.msra.mxu0 %v1675
    %1705 = vmatprep.subr.bf16.mxu0 0
    %1706 = vmatpush1.bf16.msra.mxu0 %v1674
    %1707 = vmatprep.subr.bf16.mxu0 0
    %1708 = vmatpush2.bf16.msra.mxu0 0
    %1709 = vmatprep.subr.bf16.mxu0 0
    %1710 = vmatpush2.bf16.msra.mxu0 0
    %1711 = vmatprep.subr.bf16.mxu0 0
    %1712 = vmatpush2.bf16.msra.mxu0 0
    %1713 = vmatprep.subr.bf16.mxu0 0
    %1714 = vmatpush2.bf16.msra.mxu0 0
    %1715 = vmatprep.subr.bf16.mxu0 0
    %1716 = vmatpush2.bf16.msra.mxu0 0
    %1717 = vmatprep.subr.bf16.mxu0 0
    %1718 = vmatpush2.bf16.msra.mxu0 0
    %1719 = vmatprep.subr.bf16.mxu0 0
    %1720 = vmatpush2.bf16.msra.mxu0 0
    %1721 = vmatprep.subr.bf16.mxu0 0
    %1722 = vmatpush2.bf16.msra.mxu0 0
    %1723 = vmatprep.mubr.bf16.mxu0 0
    %1724 = vmatmul.mubr.bf16.gmra.mxu0 %v1683
    %v1725 = vpop.f32.mrf.mxu0
    %v1726 = vadd.f32 %v1637, %v1725
    %v1727 = vpop.f32.mrf.mxu0
    %v1728 = vpop.f32.mrf.mxu0
    %v1729 = vadd.f32 %v1640, %v1728
    %v1730 = vpop.f32.mrf.mxu0
    %1731 = vmatprep.mubr.bf16.mxu0 0
    %1732 = vmatmul.mubr.bf16.gmra.mxu0 %v1686
    %v1733 = vpop.f32.mrf.mxu0
    %v1734 = vadd.f32 %v1645, %v1733
    %v1735 = vpop.f32.mrf.mxu0
    %v1736 = vpop.f32.mrf.mxu0
    %v1737 = vadd.f32 %v1648, %v1736
    %v1738 = vpop.f32.mrf.mxu0
    %1739 = vmatprep.mubr.bf16.mxu0 0
    %1740 = vmatmul.mubr.bf16.gmra.mxu0 %v1689
    %v1741 = vpop.f32.mrf.mxu0
    %v1742 = vadd.f32 %v1653, %v1741
    %v1743 = vpop.f32.mrf.mxu0
    %v1744 = vpop.f32.mrf.mxu0
    %v1745 = vpop.f32.mrf.mxu0
    %1746 = vdwg.mxu0
    %v1747 = vxor.u32 %v1726, 2147483648
    %v1748 = vxor.u32 %v1729, 2147483648
    %v1749 = vxor.u32 %v1734, 2147483648
    %v1750 = vxor.u32 %v1737, 2147483648
    %v1751 = vxor.u32 %v1742, 2147483648
    %v1752 = vmul.f32 %v1747, 1.442695
    %v1753 = vpow.pop %v1752
    %v1754 = vmul.f32 %v1748, 1.442695
    %v1755 = vpow.pop %v1754
    %v1756 = vmul.f32 %v1749, 1.442695
    %v1757 = vpow.pop %v1756
    %v1758 = vmul.f32 %v1750, 1.442695
    %v1759 = vpow.pop %v1758
    %v1760 = vmul.f32 %v1751, 1.442695
    %v1761 = vpow.pop %v1760
    %v1762 = vadd.f32 %v1753, 1.0
    %v1763 = vadd.f32 %v1755, 1.0
    %v1764 = vadd.f32 %v1757, 1.0
    %v1765 = vadd.f32 %v1759, 1.0
    %v1766 = vadd.f32 %v1761, 1.0
    %v1767 = vrcp.pop %v1762
    %v1768 = vmul.f32 1.0, %v1767
    %v1769 = vrcp.pop %v1763
    %v1770 = vmul.f32 1.0, %v1769
    %v1771 = vrcp.pop %v1764
    %v1772 = vmul.f32 1.0, %v1771
    %v1773 = vrcp.pop %v1765
    %v1774 = vmul.f32 1.0, %v1773
    %v1775 = vrcp.pop %v1766
    %v1776 = vmul.f32 1.0, %v1775
    %v1777 = vmul.f32 %v1768, %v1524
    %v1778 = vmul.f32 %v1770, %v1527
    %v1779 = vmul.f32 %v1772, %v1532
    %v1780 = vmul.f32 %v1774, %v1535
    %v1781 = vmul.f32 %v1776, %v1540
    %v1782 = vsub.f32 1.0, %v1768
    %v1783 = vsub.f32 1.0, %v1770
    %v1784 = vsub.f32 1.0, %v1772
    %v1785 = vsub.f32 1.0, %v1774
    %v1786 = vsub.f32 1.0, %v1776
    %v1787 = vmul.f32 %v1782, %v1472
    %v1788 = vmul.f32 %v1783, %v1473
    %v1789 = vmul.f32 %v1784, %v1474
    %v1790 = vmul.f32 %v1785, %v1475
    %v1791 = vmul.f32 %v1786, %v1476
    %v1792 = vadd.f32 %v1777, %v1787
    %v1793 = vadd.f32 %v1778, %v1788
    %v1794 = vadd.f32 %v1779, %v1789
    %v1795 = vadd.f32 %v1780, %v1790
    %v1796 = vadd.f32 %v1781, %v1791
    %v1797 = vpack.c.bf16 %v1793, %v1792
    %v1798 = vpack.c.bf16 %v1795, %v1794
    %v1799 = vpack.c.bf16 %v1796, %v1796
    %v1801 = vsel %vm599, %v1799, 0
    %1803 = vmatprep.subr.bf16.mxu0 0
    %1804 = vmatpush1.bf16.msra.mxu0 0
    %1805 = vmatprep.subr.bf16.mxu0 0
    %1806 = vmatpush1.bf16.msra.mxu0 0
    %1807 = vmatprep.subr.bf16.mxu0 0
    %1808 = vmatpush1.bf16.msra.mxu0 0
    %1809 = vmatprep.subr.bf16.mxu0 0
    %1810 = vmatpush1.bf16.msra.mxu0 0
    %1811 = vmatprep.subr.bf16.mxu0 0
    %1812 = vmatpush1.bf16.msra.mxu0 0
    %1813 = vmatprep.subr.bf16.mxu0 0
    %1814 = vmatpush1.bf16.msra.mxu0 %v1801
    %1815 = vmatprep.subr.bf16.mxu0 0
    %1816 = vmatpush1.bf16.msra.mxu0 %v1798
    %1817 = vmatprep.subr.bf16.mxu0 0
    %1818 = vmatpush1.bf16.msra.mxu0 %v1797
    %1819 = vmatprep.subr.bf16.mxu0 0
    %1820 = vmatpush2.bf16.msra.mxu0 0
    %1821 = vmatprep.subr.bf16.mxu0 0
    %1822 = vmatpush2.bf16.msra.mxu0 0
    %1823 = vmatprep.subr.bf16.mxu0 0
    %1824 = vmatpush2.bf16.msra.mxu0 0
    %1825 = vmatprep.subr.bf16.mxu0 0
    %1826 = vmatpush2.bf16.msra.mxu0 0
    %1827 = vmatprep.subr.bf16.mxu0 0
    %1828 = vmatpush2.bf16.msra.mxu0 0
    %1829 = vmatprep.subr.bf16.mxu0 0
    %1830 = vmatpush2.bf16.msra.mxu0 0
    %1831 = vmatprep.subr.bf16.mxu0 0
    %1832 = vmatpush2.bf16.msra.mxu0 0
    %1833 = vmatprep.subr.bf16.mxu0 0
    %1834 = vmatpush2.bf16.msra.mxu0 0
    %1835 = vmatprep.mubr.bf16.mxu0 0
    %1836 = vmatmul.mubr.bf16.gmra.mxu0 %v1251
    %v1837 = vpop.f32.mrf.mxu0
    %v1838 = vadd.f32 0.0, %v1837
    %v1839 = vpop.f32.mrf.mxu0
    %v1840 = vpop.f32.mrf.mxu0
    %v1841 = vadd.f32 0.0, %v1840
    %v1842 = vpop.f32.mrf.mxu0
    %1843 = vmatprep.mubr.bf16.mxu0 0
    %1844 = vmatmul.mubr.bf16.gmra.mxu0 %v1254
    %v1845 = vpop.f32.mrf.mxu0
    %v1846 = vadd.f32 0.0, %v1845
    %v1847 = vpop.f32.mrf.mxu0
    %v1848 = vpop.f32.mrf.mxu0
    %v1849 = vadd.f32 0.0, %v1848
    %v1850 = vpop.f32.mrf.mxu0
    %1851 = vmatprep.mubr.bf16.mxu0 0
    %1852 = vmatmul.mubr.bf16.gmra.mxu0 %v1257
    %v1853 = vpop.f32.mrf.mxu0
    %v1854 = vadd.f32 0.0, %v1853
    %v1855 = vpop.f32.mrf.mxu0
    %v1856 = vpop.f32.mrf.mxu0
    %v1857 = vpop.f32.mrf.mxu0
    %1858 = vdwg.mxu0
    %v1859 = vsel %vm1323, %v1792, %v1524
    %v1860 = vsel %vm1324, %v1793, %v1527
    %v1861 = vsel %vm1325, %v1794, %v1532
    %v1862 = vsel %vm1326, %v1795, %v1535
    %v1863 = vsel %vm1327, %v1796, %v1540
    %v1864 = vadd.f32 %v1859, %v1838
    %v1865 = vadd.f32 %v1860, %v1841
    %v1866 = vadd.f32 %v1861, %v1846
    %v1867 = vadd.f32 %v1862, %v1849
    %v1868 = vadd.f32 %v1863, %v1854
    %v1869 = vmul.f32 %v1864, %v1864
    %v1870 = vmul.f32 %v1865, %v1865
    %v1871 = vmul.f32 %v1866, %v1866
    %v1872 = vmul.f32 %v1867, %v1867
    %v1873 = vmul.f32 %v1868, %v1868
    %v1874 = vsel %vm486, %v1869, 0.0
    %1875 = vadd.xlane.f32.xlu0 %v1874
    %v1876 = vpop.xlane.xlu0 %1875
    %v1877 = vsel %vm486, %v1870, 0.0
    %1878 = vadd.xlane.f32.xlu0 %v1877
    %v1879 = vpop.xlane.xlu0 %1878
    %v1880 = vsel %vm486, %v1871, 0.0
    %1881 = vadd.xlane.f32.xlu0 %v1880
    %v1882 = vpop.xlane.xlu0 %1881
    %v1883 = vsel %vm486, %v1872, 0.0
    %1884 = vadd.xlane.f32.xlu0 %v1883
    %v1885 = vpop.xlane.xlu0 %1884
    %v1886 = vsel %vm486, %v1873, 0.0
    %1887 = vadd.xlane.f32.xlu0 %v1886
    %v1888 = vpop.xlane.xlu0 %1887
    %v1889 = vadd.f32 %v1876, 1e-24
    %v1890 = vadd.f32 %v1879, 1e-24
    %v1891 = vadd.f32 %v1882, 1e-24
    %v1892 = vadd.f32 %v1885, 1e-24
    %v1893 = vadd.f32 %v1888, 1e-24
    %v1894 = vrsqrt.pop %v1889
    %v1895 = vrsqrt.pop %v1890
    %v1896 = vrsqrt.pop %v1891
    %v1897 = vrsqrt.pop %v1892
    %v1898 = vrsqrt.pop %v1893
    %v1899 = vmul.f32 %v1864, %v1894
    %v1900 = vmul.f32 %v1865, %v1895
    %v1901 = vmul.f32 %v1866, %v1896
    %v1902 = vmul.f32 %v1867, %v1897
    %v1903 = vmul.f32 %v1868, %v1898
    %v1904 = vadd.f32 %v1373, %v1899
    %v1905 = vadd.f32 %v1374, %v1900
    %v1906 = vadd.f32 %v1375, %v1901
    %v1907 = vadd.f32 %v1376, %v1902
    %v1908 = vadd.f32 %v1377, %v1903
    %v1909 = vld [vmem:[%s11] sm:$0xff]
    %v1910 = vld [vmem:[%s11 + $0x8] sm:$0xff]
    %v1911 = vld [vmem:[%s11 + $0x10] sm:$0xff]
    %1912 = vset.pattern.permute.xlu0 0
    %1913 = vperm.xlu0 %1912, %v1909
    %v1914 = vpop.permute.xlu0 %1913
    %1915 = vset.pattern.permute.xlu0 0
    %1916 = vperm.xlu0 %1915, %v1910
    %v1917 = vpop.permute.xlu0 %1916
    %1918 = vset.pattern.permute.xlu0 0
    %1919 = vperm.xlu0 %1918, %v1911
    %v1920 = vpop.permute.xlu0 %1919
    %vm1921 = vcmp.eq.s32.totalorder %v66, %v1914
    %vm1922 = vcmp.eq.s32.totalorder %v66, %v1917
    %vm1923 = vcmp.eq.s32.totalorder %v66, %v1920
    %v1924 = vsel %vm1921, 1, 0
    %v1925 = vsel %vm1922, 1, 0
    %v1926 = vsel %vm1923, 1, 0
    %v1927 = vcvt.s32.f32 %v1924
    %v1928 = vcvt.s32.f32 %v1925
    %v1929 = vcvt.s32.f32 %v1926
    %v1930 = vpack.c.bf16 %v1928, %v1927
    %v1931 = vpack.c.bf16 %v1929, %v1929
    %v1932 = vpack.c.bf16 %v1905, %v1904
    %v1933 = vpack.c.bf16 %v1907, %v1906
    %v1934 = vpack.c.bf16 %v1908, %v1908
    %v1936 = vsel %vm802, %v1930, 0
    %v1939 = vsel %vm802, %v1931, 0
    %v1942 = vsel %vm599, %v1934, 0
    %1944 = vmatprep.subr.bf16.mxu0 0
    %1945 = vmatpush1.bf16.msra.mxu0 0
    %1946 = vmatprep.subr.bf16.mxu0 0
    %1947 = vmatpush1.bf16.msra.mxu0 0
    %1948 = vmatprep.subr.bf16.mxu0 0
    %1949 = vmatpush1.bf16.msra.mxu0 0
    %1950 = vmatprep.subr.bf16.mxu0 0
    %1951 = vmatpush1.bf16.msra.mxu0 0
    %1952 = vmatprep.subr.bf16.mxu0 0
    %1953 = vmatpush1.bf16.msra.mxu0 0
    %1954 = vmatprep.subr.bf16.mxu0 0
    %1955 = vmatpush1.bf16.msra.mxu0 %v1942
    %1956 = vmatprep.subr.bf16.mxu0 0
    %1957 = vmatpush1.bf16.msra.mxu0 %v1933
    %1958 = vmatprep.subr.bf16.mxu0 0
    %1959 = vmatpush1.bf16.msra.mxu0 %v1932
    %1960 = vmatprep.subr.bf16.mxu0 0
    %1961 = vmatpush2.bf16.msra.mxu0 0
    %1962 = vmatprep.subr.bf16.mxu0 0
    %1963 = vmatpush2.bf16.msra.mxu0 0
    %1964 = vmatprep.subr.bf16.mxu0 0
    %1965 = vmatpush2.bf16.msra.mxu0 0
    %1966 = vmatprep.subr.bf16.mxu0 0
    %1967 = vmatpush2.bf16.msra.mxu0 0
    %1968 = vmatprep.subr.bf16.mxu0 0
    %1969 = vmatpush2.bf16.msra.mxu0 0
    %1970 = vmatprep.subr.bf16.mxu0 0
    %1971 = vmatpush2.bf16.msra.mxu0 0
    %1972 = vmatprep.subr.bf16.mxu0 0
    %1973 = vmatpush2.bf16.msra.mxu0 0
    %1974 = vmatprep.subr.bf16.mxu0 0
    %1975 = vmatpush2.bf16.msra.mxu0 0
    %1976 = vmatprep.mubr.bf16.mxu0 0
    %1977 = vmatmul.mubr.bf16.gmra.mxu0 %v1936
    %v1978 = vpop.f32.mrf.mxu0
    %v1979 = vadd.f32 0.0, %v1978
    %v1980 = vpop.f32.mrf.mxu0
    %v1981 = vpop.f32.mrf.mxu0
    %v1982 = vadd.f32 0.0, %v1981
    %v1983 = vpop.f32.mrf.mxu0
    %1984 = vmatprep.mubr.bf16.mxu0 0
    %1985 = vmatmul.mubr.bf16.gmra.mxu0 %v1939
    %v1986 = vpop.f32.mrf.mxu0
    %v1987 = vadd.f32 0.0, %v1986
    %v1988 = vpop.f32.mrf.mxu0
    %v1989 = vpop.f32.mrf.mxu0
    %v1990 = vpop.f32.mrf.mxu0
    %1991 = vdwg.mxu0
    %v1992 = vmul.f32 %v1979, %v1982
    %v1993 = vsel %vm486, %v1992, 0.0
    %1994 = vadd.xlane.f32.xlu0 %v1993
    %v1995 = vpop.xlane.xlu0 %1994
    %v1996 = vmul.f32 %v1979, %v1987
    %v1997 = vsel %vm486, %v1996, 0.0
    %1998 = vadd.xlane.f32.xlu0 %v1997
    %v1999 = vpop.xlane.xlu0 %1998
    %v2000 = vsub.f32 %v1995, %v1999
    %v2001 = vsub.f32 0.0, %v2000
    %v2002 = vmax.f32 %v2001, 0.0
    %v2003 = vand.u32 2147483647, %v2000
    %v2004 = vsub.f32 0.0, %v2003
    %v2005 = vmul.f32 %v2004, 1.442695
    %v2006 = vpow.pop %v2005
    %v2007 = vadd.f32 %v2006, 1.0
    %v2008 = vlog2.pop %v2007
    %v2009 = vmul.f32 %v2008, 0.6931472
    %v2010 = vadd.f32 %v2002, %v2009
    %v2011 = vsub.f32 0.0, %v2010
    %vm2012 = vcmask 7168
    %v2013 = vsel %vm2012, %v2011, 0.0
    %2014 = vadd.xlane.f32.xlu0 %v2013
    %v2015 = vpop.xlane.xlu0 %2014
    %v2016 = vrot.slane %v2015, 4
    %v2017 = vadd.f32 %v2015, %v2016
    %v2018 = vrot.slane %v2017, 2
    %v2019 = vadd.f32 %v2017, %v2018
    %v2020 = vrot.slane %v2019, 1
    %v2021 = vadd.f32 %v2019, %v2020
    %s2022 = vtos %v2021
    %v2023 = vrcp.pop 8.0
    %s2024 = vtos %v2023
    %s2025 = smul.f32 %s2022, %s2024
    %s2026 = ssub.f32 0.0, %s2025
    %v2027 = vmul.f32 %v1979, %v1979
    %v2028 = vmul.f32 %v1982, %v1982
    %v2029 = vmul.f32 %v1987, %v1987
    %v2030 = vsel %vm486, %v2027, 0.0
    %v2031 = vsel %vm486, %v2028, 0.0
    %v2032 = vadd.f32 %v2030, %v2031
    %v2033 = vsel %vm486, %v2029, 0.0
    %v2034 = vadd.f32 %v2032, %v2033
    %2035 = vadd.xlane.f32.xlu0 %v2034
    %v2036 = vpop.xlane.xlu0 %2035
    %v2037 = vrot.slane %v2036, 4
    %v2038 = vadd.f32 %v2036, %v2037
    %v2039 = vrot.slane %v2038, 2
    %v2040 = vadd.f32 %v2038, %v2039
    %v2041 = vrot.slane %v2040, 1
    %v2042 = vadd.f32 %v2040, %v2041
    %s2043 = vtos %v2042
    %s2044 = smul.f32 %s2043, 0.5
    %s2045 = smul.f32 %s2044, 0.0001
    %v2046 = vrcp.pop 8.0
    %s2047 = vtos %v2046
    %s2048 = smul.f32 %s2045, %s2047
    %s2049 = sadd.f32 %s2026, %s2048
    %v2050 = vstv %s2049
    %vm2051 = vcmask 0
    %2052 = vst.msk [vmem:[#allocation2] sm:$0x1] %vm2051, %v2050
    %2053 = vst.msk [vmem:[#allocation4] sm:$0xff] %vm486, %v1904
    %2054 = vst.msk [vmem:[#allocation4 + $0x8] sm:$0xff] %vm486, %v1905
    %2055 = vst.msk [vmem:[#allocation4 + $0x10] sm:$0xff] %vm486, %v1906
    %2056 = vst.msk [vmem:[#allocation4 + $0x18] sm:$0xff] %vm486, %v1907
    %2057 = vst.msk [vmem:[#allocation4 + $0x20] sm:$0xff] %vm486, %v1908
    // Predicated region
    $region50: #{tpu_custom_call.1} parent=1 // pred_check
      _
    $region51: #{tpu_custom_call.1} parent=1 // pred_check_branch
      %2059 = sbr.rel (0) target = $region53
    $region52: #{tpu_custom_call.1} parent=1 // pred_region
      %s2061 = ssub.s32 16, 16
      %2062 = vsyncadd [#allocation3], %s2061
      %s2064 = sshll.u32 [#allocation2], 4
      %s2065 = int_to_ptr.vmem [resolvable:$true] %s2064
      %2067 = dma.vmem_to_hbm [thread:$0]  %s2065, 16, %s12, [#allocation3]
    $region53: #{tpu_custom_call.1} parent=1 // pred_fallthru
      _
    // Predicated region
    $region54: #{tpu_custom_call.1} parent=1 // pred_check
      _
    $region55: #{tpu_custom_call.1} parent=1 // pred_check_branch
      %2069 = sbr.rel (0) target = $region57
    $region56: #{tpu_custom_call.1} parent=1 // pred_region
      %s2071 = ssub.s32 640, 640
      %2072 = vsyncadd [#allocation5], %s2071
      %s2073 = sshll.u32 [#allocation4], 4
      %s2074 = int_to_ptr.vmem [resolvable:$true] %s2073
      %2079 = dma.vmem_to_hbm [thread:$0]  %s2074, 640, %s13, [#allocation5], 128, 128, 8
    $region57: #{tpu_custom_call.1} parent=1 // pred_fallthru
      _
    // Predicated region
    $region58: #{tpu_custom_call.1} parent=1 // pred_check
      _
    $region59: #{tpu_custom_call.1} parent=1 // pred_check_branch
      %2081 = sbr.rel (0) target = $region61
    $region60: #{tpu_custom_call.1} parent=1 // pred_region
      %2082 = dma.done [#allocation3], 16
    $region61: #{tpu_custom_call.1} parent=1 // pred_fallthru
      _
    // Predicated region
    $region62: #{tpu_custom_call.1} parent=1 // pred_check
      _
    $region63: #{tpu_custom_call.1} parent=1 // pred_check_branch
      %2084 = sbr.rel (0) target = $region65
    $region64: #{tpu_custom_call.1} parent=1 // pred_region
      %2085 = dma.done [#allocation5], 640
    $region65: #{tpu_custom_call.1} parent=1 // pred_fallthru
      _
    %2086 = vsyncpa [#allocation3], 1
    %2087 = vsyncpa [#allocation5], 1

</llo_original>
